<compile_context>
chip_gen: v7x
topology: tpu7x:2x2x1
jax: 0.10.0
libtpu: 0.0.40
codegen_flags: <defaults>
</compile_context>

<pallas_src>
import jax
import jax.numpy as jnp
from jax import lax
from jax.experimental import pallas as pl
from jax.experimental.pallas import tpu as pltpu

CFEAT = 1280   # efficientnet-b0 final feature channels per stream (2*1280 = 2560 -> fc)


def _make_kernel(cin, hw, tb, cc, n_chunks):
    """Build the fused kernel for static (cin, hw, tb, cc, n_chunks)."""
    inv_hw = 1.0 / float(hw)

    def kernel(x0_ref, x1_ref,
               wb0_ref, bb0_ref, wb1_ref, bb1_ref,
               wfc0_ref, wfc1_ref, bfc_ref,
               out_ref):
        # lane index row used to place per-image scalars into the (1, tb) output row
        lane = lax.broadcasted_iota(jnp.int32, (1, tb), 1)

        def chunk_contrib(w, b, wfc, x_img):
            # w: (cc, cin)  b: (cc, 1)  wfc: (cc, 1)  x_img: (cin, hw)
            # Cin is tiny: unrolled VPU broadcast FMAs instead of a K=3 MXU matmul.
            f = b                                              # (cc, 1) broadcasts
            for k in range(cin):
                f = f + w[:, k:k + 1] * x_img[k:k + 1, :]      # (cc, hw)
            # ReLU + spatial pool-sum (lane reduce, XLU) fused with the fc chunk.
            s = jnp.sum(jnp.maximum(f, 0.0), axis=1, keepdims=True)   # (cc, 1)
            return jnp.sum(s * wfc, axis=0, keepdims=True)             # (1, 1)

        def chunk_body(j, acc):
            c0 = pl.multiple_of(j * cc, cc)
            w0 = wb0_ref[pl.ds(c0, cc), :]
            b0 = bb0_ref[pl.ds(c0, cc), :]
            g0 = wfc0_ref[pl.ds(c0, cc), :]
            w1 = wb1_ref[pl.ds(c0, cc), :]
            b1 = bb1_ref[pl.ds(c0, cc), :]
            g1 = wfc1_ref[pl.ds(c0, cc), :]
            for t in range(tb):                    # static unroll over the batch block
                x0i = x0_ref[t]                    # (cin, hw)
                x1i = x1_ref[t]
                c = chunk_contrib(w0, b0, g0, x0i) + chunk_contrib(w1, b1, g1, x1i)
                acc = acc + jnp.where(lane == t, c, 0.0)
            return acc

        acc = lax.fori_loop(0, n_chunks, chunk_body,
                            jnp.zeros((1, tb), jnp.float32))

        # cat(dim=1) -> dropout(eval: identity) -> fc(2560->1) already folded in;
        # finish: mean normalization + bias, then a numerically stable sigmoid.
        z = acc * inv_hw + bfc_ref[...]                       # (1, tb) logits
        e = jnp.exp(-jnp.abs(z))
        out_ref[...] = jnp.where(z >= 0.0, 1.0 / (1.0 + e), e / (1.0 + e))

    return kernel


def boson_probe_forward(x, params, *, tb=8, cc=128):
    """x: (2, B, Cin, H, W) float32 (two views, NCHW like the PyTorch module)."""
    two, B, Cin, H, W = x.shape
    assert two == 2
    assert CFEAT % cc == 0
    HW = H * W

    # NCHW -> (B, Cin, HW): pure reshape (no transpose); HW sits on the lane axis.
    x0 = x[0].reshape(B, Cin, HW)
    x1 = x[1].reshape(B, Cin, HW)

    # Batch blocking: TB images per grid step, lane-dense (1, TB) output row.
    tb = max(1, min(tb, B))
    G = pl.cdiv(B, tb)
    B_pad = G * tb
    if B_pad != B:
        pad = B_pad - B
        zpad = jnp.zeros((pad, Cin, HW), x0.dtype)
        x0 = jnp.concatenate([x0, zpad], axis=0)
        x1 = jnp.concatenate([x1, zpad], axis=0)

    wb0t, bb0, wb1t, bb1, wfc0, wfc1, bfc = params
    kernel = _make_kernel(Cin, HW, tb, cc, CFEAT // cc)

    out = pl.pallas_call(
        kernel,
        out_shape=jax.ShapeDtypeStruct((G, tb), jnp.float32),
        grid_spec=pltpu.PrefetchScalarGridSpec(
            num_scalar_prefetch=0,
            grid=(G,),
            in_specs=[
                pl.BlockSpec((tb, Cin, HW), lambda g: (g, 0, 0)),   # x0 batch block
                pl.BlockSpec((tb, Cin, HW), lambda g: (g, 0, 0)),   # x1 batch block
                pl.BlockSpec((CFEAT, Cin), lambda g: (0, 0)),       # backbone0 weight^T
                pl.BlockSpec((CFEAT, 1), lambda g: (0, 0)),         # backbone0 bias
                pl.BlockSpec((CFEAT, Cin), lambda g: (0, 0)),       # backbone1 weight^T
                pl.BlockSpec((CFEAT, 1), lambda g: (0, 0)),         # backbone1 bias
                pl.BlockSpec((CFEAT, 1), lambda g: (0, 0)),         # fc weight (stream 0 half)
                pl.BlockSpec((CFEAT, 1), lambda g: (0, 0)),         # fc weight (stream 1 half)
                pl.BlockSpec((1, 1), lambda g: (0, 0)),             # fc bias
            ],
            out_specs=pl.BlockSpec((1, tb), lambda g: (g, 0)),      # one lane-dense row/step
        ),
        compiler_params=pltpu.CompilerParams(
            dimension_semantics=("parallel",)),
    )(x0, x1, wb0t, bb0, wb1t, bb1, wfc0, wfc1, bfc)

    return out.reshape(-1)[:B]   # .flatten() in the PyTorch module


def init_params(key, cin):
    ks = jax.random.split(key, 7)
    # backbone weights stored transposed as (CFEAT, Cin) for the (Cin, HW) layout
    wb0t = jax.random.normal(ks[0], (CFEAT, cin), jnp.float32) * 0.1
    bb0 = jax.random.normal(ks[1], (CFEAT, 1), jnp.float32) * 0.01
    wb1t = jax.random.normal(ks[2], (CFEAT, cin), jnp.float32) * 0.1
    bb1 = jax.random.normal(ks[3], (CFEAT, 1), jnp.float32) * 0.01
    # nn.Linear(2560, 1): split into the two 1280-chunks each stream contributes
    wfc0 = jax.random.normal(ks[4], (CFEAT, 1), jnp.float32) * 0.02
    wfc1 = jax.random.normal(ks[5], (CFEAT, 1), jnp.float32) * 0.02
    bfc = jax.random.normal(ks[6], (1, 1), jnp.float32) * 0.01
    return (wb0t, bb0, wb1t, bb1, wfc0, wfc1, bfc)


def reference_forward(x, params):
    """Pure-JAX reference of the same forward pass (for correctness check)."""
    wb0t, bb0, wb1t, bb1, wfc0, wfc1, bfc = params
    two, B, Cin, H, W = x.shape
    x0 = x[0].reshape(B, Cin, H * W)
    x1 = x[1].reshape(B, Cin, H * W)
    f0 = jnp.einsum('bch,oc->boh', x0, wb0t) + bb0[None, :, 0:1]
    f1 = jnp.einsum('bch,oc->boh', x1, wb1t) + bb1[None, :, 0:1]
    p0 = jnp.mean(jnp.maximum(f0, 0.0), axis=2)      # (B, CFEAT)
    p1 = jnp.mean(jnp.maximum(f1, 0.0), axis=2)
    z = p0 @ wfc0 + p1 @ wfc1 + bfc[0]               # (B, 1)
    return jax.nn.sigmoid(z).reshape(-1)


if __name__ == "__main__":
    key = jax.random.PRNGKey(0)
    k_x, k_p = jax.random.split(key)

    B, Cin, H, W = 2, 3, 16, 16
    x = jax.random.normal(k_x, (2, B, Cin, H, W), jnp.float32)   # two views, NCHW
    params = init_params(k_p, Cin)

    y = boson_probe_forward(x, params)
    jax.block_until_ready(y)

    y_ref = reference_forward(x, params)
    jax.block_until_ready(y_ref)

    assert y.shape == (B,)
    assert bool(jnp.all(jnp.isfinite(y)))
    assert bool(jnp.all((y >= 0.0) & (y <= 1.0)))
    assert bool(jnp.allclose(y, y_ref, atol=2e-5, rtol=2e-4))
    print("KERNEL_OK")
</pallas_src>

<mosaic_0001>
module attributes {stable_mosaic.version = 11 : i64} {
  func.func @kernel(%arg0: i32, %arg1: memref<2x3x256xf32, #tpu.memory_space<vmem>>, %arg2: memref<2x3x256xf32, #tpu.memory_space<vmem>>, %arg3: memref<1280x3xf32, #tpu.memory_space<vmem>>, %arg4: memref<1280x1xf32, #tpu.memory_space<vmem>>, %arg5: memref<1280x3xf32, #tpu.memory_space<vmem>>, %arg6: memref<1280x1xf32, #tpu.memory_space<vmem>>, %arg7: memref<1280x1xf32, #tpu.memory_space<vmem>>, %arg8: memref<1280x1xf32, #tpu.memory_space<vmem>>, %arg9: memref<1x1xf32, #tpu.memory_space<vmem>>, %arg10: memref<1x2xf32, #tpu.memory_space<vmem>>) attributes {dimension_semantics = [#tpu.dimension_semantics<parallel>], iteration_bounds = array<i64: 1>, scalar_prefetch = 0 : i64, scratch_operands = 0 : i64, tpu.core_type = #tpu.core_type<tc>, window_params = [{transform_indices = @transform_0, window_bounds = array<i64: 2, 3, 256>}, {transform_indices = @transform_1, window_bounds = array<i64: 2, 3, 256>}, {pipeline_mode = #tpu.pipeline_mode<synchronous>, transform_indices = @transform_2, window_bounds = array<i64: 1280, 3>}, {pipeline_mode = #tpu.pipeline_mode<synchronous>, transform_indices = @transform_3, window_bounds = array<i64: 1280, 1>}, {pipeline_mode = #tpu.pipeline_mode<synchronous>, transform_indices = @transform_4, window_bounds = array<i64: 1280, 3>}, {pipeline_mode = #tpu.pipeline_mode<synchronous>, transform_indices = @transform_5, window_bounds = array<i64: 1280, 1>}, {pipeline_mode = #tpu.pipeline_mode<synchronous>, transform_indices = @transform_6, window_bounds = array<i64: 1280, 1>}, {pipeline_mode = #tpu.pipeline_mode<synchronous>, transform_indices = @transform_7, window_bounds = array<i64: 1280, 1>}, {pipeline_mode = #tpu.pipeline_mode<synchronous>, transform_indices = @transform_8, window_bounds = array<i64: 1, 1>}, {transform_indices = @transform_9, window_bounds = array<i64: 1, 2>}]} {
    %0 = tpu.iota {dimensions = array<i32: 1>} : vector<1x2xi32>
    %cst = arith.constant 0.000000e+00 : f32
    %1 = vector.broadcast %cst : f32 to vector<1x2xf32>
    %c0_i32 = arith.constant 0 : i32
    %c10_i32 = arith.constant 10 : i32
    %2 = arith.addi %c0_i32, %c10_i32 : i32
    %c1_i32 = arith.constant 1 : i32
    %3 = scf.for %arg11 = %c0_i32 to %2 step %c1_i32 iter_args(%arg12 = %1) -> (vector<1x2xf32>)  : i32 {
      %c128_i32 = arith.constant 128 : i32
      %24 = arith.muli %arg11, %c128_i32 : i32
      %25 = tpu.assume_multiple %24, 128 : i32
      %26 = arith.index_cast %25 : i32 to index
      %c0_10 = arith.constant 0 : index
      %27 = vector.load %arg3[%26, %c0_10] : memref<1280x3xf32, #tpu.memory_space<vmem>>, vector<128x3xf32>
      %28 = arith.index_cast %25 : i32 to index
      %c0_11 = arith.constant 0 : index
      %29 = vector.load %arg4[%28, %c0_11] : memref<1280x1xf32, #tpu.memory_space<vmem>>, vector<128x1xf32>
      %30 = arith.index_cast %25 : i32 to index
      %c0_12 = arith.constant 0 : index
      %31 = vector.load %arg7[%30, %c0_12] : memref<1280x1xf32, #tpu.memory_space<vmem>>, vector<128x1xf32>
      %32 = arith.index_cast %25 : i32 to index
      %c0_13 = arith.constant 0 : index
      %33 = vector.load %arg5[%32, %c0_13] : memref<1280x3xf32, #tpu.memory_space<vmem>>, vector<128x3xf32>
      %34 = arith.index_cast %25 : i32 to index
      %c0_14 = arith.constant 0 : index
      %35 = vector.load %arg6[%34, %c0_14] : memref<1280x1xf32, #tpu.memory_space<vmem>>, vector<128x1xf32>
      %36 = arith.index_cast %25 : i32 to index
      %c0_15 = arith.constant 0 : index
      %37 = vector.load %arg8[%36, %c0_15] : memref<1280x1xf32, #tpu.memory_space<vmem>>, vector<128x1xf32>
      %c0_16 = arith.constant 0 : index
      %c0_17 = arith.constant 0 : index
      %c0_18 = arith.constant 0 : index
      %38 = vector.load %arg1[%c0_16, %c0_17, %c0_18] : memref<2x3x256xf32, #tpu.memory_space<vmem>>, vector<1x3x256xf32>
      %39 = vector.shape_cast %38 : vector<1x3x256xf32> to vector<3x256xf32>
      %c0_19 = arith.constant 0 : index
      %c0_20 = arith.constant 0 : index
      %c0_21 = arith.constant 0 : index
      %40 = vector.load %arg2[%c0_19, %c0_20, %c0_21] : memref<2x3x256xf32, #tpu.memory_space<vmem>>, vector<1x3x256xf32>
      %41 = vector.shape_cast %40 : vector<1x3x256xf32> to vector<3x256xf32>
      %42 = vector.extract_strided_slice %27 {offsets = [0, 0], sizes = [128, 1], strides = [1, 1]} : vector<128x3xf32> to vector<128x1xf32>
      %43 = vector.extract_strided_slice %39 {offsets = [0, 0], sizes = [1, 256], strides = [1, 1]} : vector<3x256xf32> to vector<1x256xf32>
      %44 = vector.broadcast %42 : vector<128x1xf32> to vector<128x256xf32>
      %45 = vector.broadcast %43 : vector<1x256xf32> to vector<128x256xf32>
      %46 = arith.mulf %44, %45 : vector<128x256xf32>
      %47 = vector.broadcast %29 : vector<128x1xf32> to vector<128x256xf32>
      %48 = arith.addf %47, %46 : vector<128x256xf32>
      %49 = vector.extract_strided_slice %27 {offsets = [0, 1], sizes = [128, 1], strides = [1, 1]} : vector<128x3xf32> to vector<128x1xf32>
      %50 = vector.extract_strided_slice %39 {offsets = [1, 0], sizes = [1, 256], strides = [1, 1]} : vector<3x256xf32> to vector<1x256xf32>
      %51 = vector.broadcast %49 : vector<128x1xf32> to vector<128x256xf32>
      %52 = vector.broadcast %50 : vector<1x256xf32> to vector<128x256xf32>
      %53 = arith.mulf %51, %52 : vector<128x256xf32>
      %54 = arith.addf %48, %53 : vector<128x256xf32>
      %55 = vector.extract_strided_slice %27 {offsets = [0, 2], sizes = [128, 1], strides = [1, 1]} : vector<128x3xf32> to vector<128x1xf32>
      %56 = vector.extract_strided_slice %39 {offsets = [2, 0], sizes = [1, 256], strides = [1, 1]} : vector<3x256xf32> to vector<1x256xf32>
      %57 = vector.broadcast %55 : vector<128x1xf32> to vector<128x256xf32>
      %58 = vector.broadcast %56 : vector<1x256xf32> to vector<128x256xf32>
      %59 = arith.mulf %57, %58 : vector<128x256xf32>
      %60 = arith.addf %54, %59 : vector<128x256xf32>
      %cst_22 = arith.constant 0.000000e+00 : f32
      %61 = vector.broadcast %cst_22 : f32 to vector<128x256xf32>
      %62 = arith.maximumf %60, %61 : vector<128x256xf32>
      %cst_23 = arith.constant dense<0.000000e+00> : vector<128xf32>
      %63 = vector.multi_reduction <add>, %62, %cst_23 [1] : vector<128x256xf32> to vector<128xf32>
      %64 = vector.shape_cast %63 : vector<128xf32> to vector<128x1xf32>
      %65 = arith.mulf %64, %31 : vector<128x1xf32>
      %cst_24 = arith.constant dense<0.000000e+00> : vector<1xf32>
      %66 = vector.multi_reduction <add>, %65, %cst_24 [0] : vector<128x1xf32> to vector<1xf32>
      %67 = vector.shape_cast %66 : vector<1xf32> to vector<1x1xf32>
      %68 = vector.extract_strided_slice %33 {offsets = [0, 0], sizes = [128, 1], strides = [1, 1]} : vector<128x3xf32> to vector<128x1xf32>
      %69 = vector.extract_strided_slice %41 {offsets = [0, 0], sizes = [1, 256], strides = [1, 1]} : vector<3x256xf32> to vector<1x256xf32>
      %70 = vector.broadcast %68 : vector<128x1xf32> to vector<128x256xf32>
      %71 = vector.broadcast %69 : vector<1x256xf32> to vector<128x256xf32>
      %72 = arith.mulf %70, %71 : vector<128x256xf32>
      %73 = vector.broadcast %35 : vector<128x1xf32> to vector<128x256xf32>
      %74 = arith.addf %73, %72 : vector<128x256xf32>
      %75 = vector.extract_strided_slice %33 {offsets = [0, 1], sizes = [128, 1], strides = [1, 1]} : vector<128x3xf32> to vector<128x1xf32>
      %76 = vector.extract_strided_slice %41 {offsets = [1, 0], sizes = [1, 256], strides = [1, 1]} : vector<3x256xf32> to vector<1x256xf32>
      %77 = vector.broadcast %75 : vector<128x1xf32> to vector<128x256xf32>
      %78 = vector.broadcast %76 : vector<1x256xf32> to vector<128x256xf32>
      %79 = arith.mulf %77, %78 : vector<128x256xf32>
      %80 = arith.addf %74, %79 : vector<128x256xf32>
      %81 = vector.extract_strided_slice %33 {offsets = [0, 2], sizes = [128, 1], strides = [1, 1]} : vector<128x3xf32> to vector<128x1xf32>
      %82 = vector.extract_strided_slice %41 {offsets = [2, 0], sizes = [1, 256], strides = [1, 1]} : vector<3x256xf32> to vector<1x256xf32>
      %83 = vector.broadcast %81 : vector<128x1xf32> to vector<128x256xf32>
      %84 = vector.broadcast %82 : vector<1x256xf32> to vector<128x256xf32>
      %85 = arith.mulf %83, %84 : vector<128x256xf32>
      %86 = arith.addf %80, %85 : vector<128x256xf32>
      %cst_25 = arith.constant 0.000000e+00 : f32
      %87 = vector.broadcast %cst_25 : f32 to vector<128x256xf32>
      %88 = arith.maximumf %86, %87 : vector<128x256xf32>
      %cst_26 = arith.constant dense<0.000000e+00> : vector<128xf32>
      %89 = vector.multi_reduction <add>, %88, %cst_26 [1] : vector<128x256xf32> to vector<128xf32>
      %90 = vector.shape_cast %89 : vector<128xf32> to vector<128x1xf32>
      %91 = arith.mulf %90, %37 : vector<128x1xf32>
      %cst_27 = arith.constant dense<0.000000e+00> : vector<1xf32>
      %92 = vector.multi_reduction <add>, %91, %cst_27 [0] : vector<128x1xf32> to vector<1xf32>
      %93 = vector.shape_cast %92 : vector<1xf32> to vector<1x1xf32>
      %94 = arith.addf %67, %93 : vector<1x1xf32>
      %c0_i32_28 = arith.constant 0 : i32
      %95 = vector.broadcast %c0_i32_28 : i32 to vector<1x2xi32>
      %96 = arith.cmpi eq, %0, %95 : vector<1x2xi32>
      %cst_29 = arith.constant 0.000000e+00 : f32
      %97 = vector.shape_cast %94 : vector<1x1xf32> to vector<1x1xf32>
      %98 = vector.broadcast %97 : vector<1x1xf32> to vector<1x2xf32>
      %99 = vector.broadcast %cst_29 : f32 to vector<1x2xf32>
      %100 = arith.select %96, %98, %99 : vector<1x2xi1>, vector<1x2xf32>
      %101 = arith.addf %arg12, %100 : vector<1x2xf32>
      %c1 = arith.constant 1 : index
      %c0_30 = arith.constant 0 : index
      %c0_31 = arith.constant 0 : index
      %102 = vector.load %arg1[%c1, %c0_30, %c0_31] : memref<2x3x256xf32, #tpu.memory_space<vmem>>, vector<1x3x256xf32>
      %103 = vector.shape_cast %102 : vector<1x3x256xf32> to vector<3x256xf32>
      %c1_32 = arith.constant 1 : index
      %c0_33 = arith.constant 0 : index
      %c0_34 = arith.constant 0 : index
      %104 = vector.load %arg2[%c1_32, %c0_33, %c0_34] : memref<2x3x256xf32, #tpu.memory_space<vmem>>, vector<1x3x256xf32>
      %105 = vector.shape_cast %104 : vector<1x3x256xf32> to vector<3x256xf32>
      %106 = vector.extract_strided_slice %27 {offsets = [0, 0], sizes = [128, 1], strides = [1, 1]} : vector<128x3xf32> to vector<128x1xf32>
      %107 = vector.extract_strided_slice %103 {offsets = [0, 0], sizes = [1, 256], strides = [1, 1]} : vector<3x256xf32> to vector<1x256xf32>
      %108 = vector.broadcast %106 : vector<128x1xf32> to vector<128x256xf32>
      %109 = vector.broadcast %107 : vector<1x256xf32> to vector<128x256xf32>
      %110 = arith.mulf %108, %109 : vector<128x256xf32>
      %111 = vector.broadcast %29 : vector<128x1xf32> to vector<128x256xf32>
      %112 = arith.addf %111, %110 : vector<128x256xf32>
      %113 = vector.extract_strided_slice %27 {offsets = [0, 1], sizes = [128, 1], strides = [1, 1]} : vector<128x3xf32> to vector<128x1xf32>
      %114 = vector.extract_strided_slice %103 {offsets = [1, 0], sizes = [1, 256], strides = [1, 1]} : vector<3x256xf32> to vector<1x256xf32>
      %115 = vector.broadcast %113 : vector<128x1xf32> to vector<128x256xf32>
      %116 = vector.broadcast %114 : vector<1x256xf32> to vector<128x256xf32>
      %117 = arith.mulf %115, %116 : vector<128x256xf32>
      %118 = arith.addf %112, %117 : vector<128x256xf32>
      %119 = vector.extract_strided_slice %27 {offsets = [0, 2], sizes = [128, 1], strides = [1, 1]} : vector<128x3xf32> to vector<128x1xf32>
      %120 = vector.extract_strided_slice %103 {offsets = [2, 0], sizes = [1, 256], strides = [1, 1]} : vector<3x256xf32> to vector<1x256xf32>
      %121 = vector.broadcast %119 : vector<128x1xf32> to vector<128x256xf32>
      %122 = vector.broadcast %120 : vector<1x256xf32> to vector<128x256xf32>
      %123 = arith.mulf %121, %122 : vector<128x256xf32>
      %124 = arith.addf %118, %123 : vector<128x256xf32>
      %cst_35 = arith.constant 0.000000e+00 : f32
      %125 = vector.broadcast %cst_35 : f32 to vector<128x256xf32>
      %126 = arith.maximumf %124, %125 : vector<128x256xf32>
      %cst_36 = arith.constant dense<0.000000e+00> : vector<128xf32>
      %127 = vector.multi_reduction <add>, %126, %cst_36 [1] : vector<128x256xf32> to vector<128xf32>
      %128 = vector.shape_cast %127 : vector<128xf32> to vector<128x1xf32>
      %129 = arith.mulf %128, %31 : vector<128x1xf32>
      %cst_37 = arith.constant dense<0.000000e+00> : vector<1xf32>
      %130 = vector.multi_reduction <add>, %129, %cst_37 [0] : vector<128x1xf32> to vector<1xf32>
      %131 = vector.shape_cast %130 : vector<1xf32> to vector<1x1xf32>
      %132 = vector.extract_strided_slice %33 {offsets = [0, 0], sizes = [128, 1], strides = [1, 1]} : vector<128x3xf32> to vector<128x1xf32>
      %133 = vector.extract_strided_slice %105 {offsets = [0, 0], sizes = [1, 256], strides = [1, 1]} : vector<3x256xf32> to vector<1x256xf32>
      %134 = vector.broadcast %132 : vector<128x1xf32> to vector<128x256xf32>
      %135 = vector.broadcast %133 : vector<1x256xf32> to vector<128x256xf32>
      %136 = arith.mulf %134, %135 : vector<128x256xf32>
      %137 = vector.broadcast %35 : vector<128x1xf32> to vector<128x256xf32>
      %138 = arith.addf %137, %136 : vector<128x256xf32>
      %139 = vector.extract_strided_slice %33 {offsets = [0, 1], sizes = [128, 1], strides = [1, 1]} : vector<128x3xf32> to vector<128x1xf32>
      %140 = vector.extract_strided_slice %105 {offsets = [1, 0], sizes = [1, 256], strides = [1, 1]} : vector<3x256xf32> to vector<1x256xf32>
      %141 = vector.broadcast %139 : vector<128x1xf32> to vector<128x256xf32>
      %142 = vector.broadcast %140 : vector<1x256xf32> to vector<128x256xf32>
      %143 = arith.mulf %141, %142 : vector<128x256xf32>
      %144 = arith.addf %138, %143 : vector<128x256xf32>
      %145 = vector.extract_strided_slice %33 {offsets = [0, 2], sizes = [128, 1], strides = [1, 1]} : vector<128x3xf32> to vector<128x1xf32>
      %146 = vector.extract_strided_slice %105 {offsets = [2, 0], sizes = [1, 256], strides = [1, 1]} : vector<3x256xf32> to vector<1x256xf32>
      %147 = vector.broadcast %145 : vector<128x1xf32> to vector<128x256xf32>
      %148 = vector.broadcast %146 : vector<1x256xf32> to vector<128x256xf32>
      %149 = arith.mulf %147, %148 : vector<128x256xf32>
      %150 = arith.addf %144, %149 : vector<128x256xf32>
      %cst_38 = arith.constant 0.000000e+00 : f32
      %151 = vector.broadcast %cst_38 : f32 to vector<128x256xf32>
      %152 = arith.maximumf %150, %151 : vector<128x256xf32>
      %cst_39 = arith.constant dense<0.000000e+00> : vector<128xf32>
      %153 = vector.multi_reduction <add>, %152, %cst_39 [1] : vector<128x256xf32> to vector<128xf32>
      %154 = vector.shape_cast %153 : vector<128xf32> to vector<128x1xf32>
      %155 = arith.mulf %154, %37 : vector<128x1xf32>
      %cst_40 = arith.constant dense<0.000000e+00> : vector<1xf32>
      %156 = vector.multi_reduction <add>, %155, %cst_40 [0] : vector<128x1xf32> to vector<1xf32>
      %157 = vector.shape_cast %156 : vector<1xf32> to vector<1x1xf32>
      %158 = arith.addf %131, %157 : vector<1x1xf32>
      %c1_i32_41 = arith.constant 1 : i32
      %159 = vector.broadcast %c1_i32_41 : i32 to vector<1x2xi32>
      %160 = arith.cmpi eq, %0, %159 : vector<1x2xi32>
      %cst_42 = arith.constant 0.000000e+00 : f32
      %161 = vector.shape_cast %158 : vector<1x1xf32> to vector<1x1xf32>
      %162 = vector.broadcast %161 : vector<1x1xf32> to vector<1x2xf32>
      %163 = vector.broadcast %cst_42 : f32 to vector<1x2xf32>
      %164 = arith.select %160, %162, %163 : vector<1x2xi1>, vector<1x2xf32>
      %165 = arith.addf %101, %164 : vector<1x2xf32>
      scf.yield %165 : vector<1x2xf32>
    }
    %c10_i32_0 = arith.constant 10 : i32
    %cst_1 = arith.constant 3.906250e-03 : f32
    %4 = vector.broadcast %cst_1 : f32 to vector<1x2xf32>
    %5 = arith.mulf %3, %4 : vector<1x2xf32>
    %c0 = arith.constant 0 : index
    %c0_2 = arith.constant 0 : index
    %6 = vector.load %arg9[%c0, %c0_2] : memref<1x1xf32, #tpu.memory_space<vmem>>, vector<1x1xf32>
    %7 = vector.broadcast %6 : vector<1x1xf32> to vector<1x2xf32>
    %8 = arith.addf %5, %7 : vector<1x2xf32>
    %9 = math.absf %8 : vector<1x2xf32>
    %cst_3 = arith.constant 0.000000e+00 : f32
    %10 = vector.broadcast %cst_3 : f32 to vector<1x2xf32>
    %11 = arith.subf %10, %9 : vector<1x2xf32>
    %12 = math.exp %11 : vector<1x2xf32>
    %cst_4 = arith.constant 0.000000e+00 : f32
    %13 = vector.broadcast %cst_4 : f32 to vector<1x2xf32>
    %14 = arith.cmpf oge, %8, %13 : vector<1x2xf32>
    %cst_5 = arith.constant 1.000000e+00 : f32
    %15 = vector.broadcast %cst_5 : f32 to vector<1x2xf32>
    %16 = arith.addf %15, %12 : vector<1x2xf32>
    %cst_6 = arith.constant 1.000000e+00 : f32
    %17 = vector.broadcast %cst_6 : f32 to vector<1x2xf32>
    %18 = arith.divf %17, %16 : vector<1x2xf32>
    %cst_7 = arith.constant 1.000000e+00 : f32
    %19 = vector.broadcast %cst_7 : f32 to vector<1x2xf32>
    %20 = arith.addf %19, %12 : vector<1x2xf32>
    %21 = arith.divf %12, %20 : vector<1x2xf32>
    %22 = arith.select %14, %18, %21 : vector<1x2xi1>, vector<1x2xf32>
    %c0_8 = arith.constant 0 : index
    %c0_9 = arith.constant 0 : index
    %23 = vector.load %arg10[%c0_8, %c0_9] : memref<1x2xf32, #tpu.memory_space<vmem>>, vector<1x2xf32>
    tpu.vector_store %arg10[%c0_8, %c0_9], %22 {strides = array<i32>} : memref<1x2xf32, #tpu.memory_space<vmem>>, vector<1x2xf32>,
    return
  }
  func.func @transform_0(%arg0: i32) -> (i32, i32, i32) {
    %c0_i32 = arith.constant 0 : i32
    %c0_i32_0 = arith.constant 0 : i32
    %c0_i32_1 = arith.constant 0 : i32
    return %arg0, %c0_i32, %c0_i32_0 : i32, i32, i32
  }
  func.func @transform_1(%arg0: i32) -> (i32, i32, i32) {
    %c0_i32 = arith.constant 0 : i32
    %c0_i32_0 = arith.constant 0 : i32
    %c0_i32_1 = arith.constant 0 : i32
    return %arg0, %c0_i32, %c0_i32_0 : i32, i32, i32
  }
  func.func @transform_2(%arg0: i32) -> (i32, i32) {
    %c0_i32 = arith.constant 0 : i32
    %c0_i32_0 = arith.constant 0 : i32
    %c0_i32_1 = arith.constant 0 : i32
    return %c0_i32, %c0_i32_0 : i32, i32
  }
  func.func @transform_3(%arg0: i32) -> (i32, i32) {
    %c0_i32 = arith.constant 0 : i32
    %c0_i32_0 = arith.constant 0 : i32
    %c0_i32_1 = arith.constant 0 : i32
    return %c0_i32, %c0_i32_0 : i32, i32
  }
  func.func @transform_4(%arg0: i32) -> (i32, i32) {
    %c0_i32 = arith.constant 0 : i32
    %c0_i32_0 = arith.constant 0 : i32
    %c0_i32_1 = arith.constant 0 : i32
    return %c0_i32, %c0_i32_0 : i32, i32
  }
  func.func @transform_5(%arg0: i32) -> (i32, i32) {
    %c0_i32 = arith.constant 0 : i32
    %c0_i32_0 = arith.constant 0 : i32
    %c0_i32_1 = arith.constant 0 : i32
    return %c0_i32, %c0_i32_0 : i32, i32
  }
  func.func @transform_6(%arg0: i32) -> (i32, i32) {
    %c0_i32 = arith.constant 0 : i32
    %c0_i32_0 = arith.constant 0 : i32
    %c0_i32_1 = arith.constant 0 : i32
    return %c0_i32, %c0_i32_0 : i32, i32
  }
  func.func @transform_7(%arg0: i32) -> (i32, i32) {
    %c0_i32 = arith.constant 0 : i32
    %c0_i32_0 = arith.constant 0 : i32
    %c0_i32_1 = arith.constant 0 : i32
    return %c0_i32, %c0_i32_0 : i32, i32
  }
  func.func @transform_8(%arg0: i32) -> (i32, i32) {
    %c0_i32 = arith.constant 0 : i32
    %c0_i32_0 = arith.constant 0 : i32
    %c0_i32_1 = arith.constant 0 : i32
    return %c0_i32, %c0_i32_0 : i32, i32
  }
  func.func @transform_9(%arg0: i32) -> (i32, i32) {
    %c0_i32 = arith.constant 0 : i32
    %c0_i32_0 = arith.constant 0 : i32
    return %arg0, %c0_i32 : i32, i32
  }
}

</mosaic_0001>

<llo_original>
// kernel: tpu_custom_call.1
$region0: #{tpu_custom_call.1}
  #allocation0 [shape = 'u32[]', space=smem, size = 0x4, offset = 0x4, fixed_abs, tag = 'smem constant byte address 0x4 - core index']
  #allocation1 [shape = 'u32[144,128]{1,0:T(1,128)}', space=vmem, size = 0x12000, scoped, tag = 'internal scratch']
  #allocation2 [shape = 'f32[1,1]{1,0:T(1,128)S(1)}', space=vmem, size = 0x200, scoped, tag = 'scoped memory for tpu_custom_call.1']
  %s0 = inlined_call_operand.vmem [shape: f32[2,3,256], index: 0, kind: input, shape index: {}]
  %s1 = inlined_call_operand.vmem [shape: f32[2,3,256], index: 1, kind: input, shape index: {}]
  %s2 = inlined_call_operand.vmem [shape: f32[1280,3], index: 2, kind: input, shape index: {}]
  %s3 = inlined_call_operand.vmem [shape: f32[1280,1], index: 3, kind: input, shape index: {}]
  %s4 = inlined_call_operand.vmem [shape: f32[1280,3], index: 4, kind: input, shape index: {}]
  %s5 = inlined_call_operand.vmem [shape: f32[1280,1], index: 5, kind: input, shape index: {}]
  %s6 = inlined_call_operand.vmem [shape: f32[1280,1], index: 6, kind: input, shape index: {}]
  %s7 = inlined_call_operand.vmem [shape: f32[1280,1], index: 7, kind: input, shape index: {}]
  %s8 = inlined_call_operand.<no memory space> [shape: f32[1,1], index: 8, kind: input, shape index: {}]
  %s9 = inlined_call_operand.hbm [shape: f32[1,2], index: 9, kind: output, shape index: {}]
  %s10 = sld [smem:[#allocation0]]
  $region53: #{tpu_custom_call.1} parent=0
    _
  %s12 = ssub.s32 1, %s10
  %s13 = scalar_select 0, %s12, %s10
  %v14 = vstv %s8
  %15 = vst [vmem:[#allocation2] sm:$0x1] %v14
  $region1: #{tpu_custom_call.1} parent=0
    #allocation3 [shape = 'u8[512]{0}', space=vmem, size = 0x400, scoped, tag = 'output window, operand 0, single buffered']
    #allocation4 [shape = 's32[1]{0}', space=sflag, size = 0x4, scoped, tag = 'scoped memory for tpu_custom_call.1']
    %16 = vsyncpa [#allocation4], 0
    // Predicated region
    $region2: #{tpu_custom_call.1} parent=1 // pred_check
      _
    $region3: #{tpu_custom_call.1} parent=1 // pred_check_branch
      %18 = sbr.rel (0) target = $region5
    $region4: #{tpu_custom_call.1} parent=1 // pred_region
      _
    $region5: #{tpu_custom_call.1} parent=1 // pred_fallthru
      _
    // Predicated region
    $region6: #{tpu_custom_call.1} parent=1 // pred_check
      _
    $region7: #{tpu_custom_call.1} parent=1 // pred_check_branch
      %20 = sbr.rel (0) target = $region9
    $region8: #{tpu_custom_call.1} parent=1 // pred_region
      _
    $region9: #{tpu_custom_call.1} parent=1 // pred_fallthru
      _
    // Predicated region
    $region10: #{tpu_custom_call.1} parent=1 // pred_check
      _
    $region11: #{tpu_custom_call.1} parent=1 // pred_check_branch
      %22 = sbr.rel (0) target = $region13
    $region12: #{tpu_custom_call.1} parent=1 // pred_region
      _
    $region13: #{tpu_custom_call.1} parent=1 // pred_fallthru
      _
    // Predicated region
    $region14: #{tpu_custom_call.1} parent=1 // pred_check
      _
    $region15: #{tpu_custom_call.1} parent=1 // pred_check_branch
      %24 = sbr.rel (0) target = $region17
    $region16: #{tpu_custom_call.1} parent=1 // pred_region
      _
    $region17: #{tpu_custom_call.1} parent=1 // pred_fallthru
      _
    // Predicated region
    $region18: #{tpu_custom_call.1} parent=1 // pred_check
      _
    $region19: #{tpu_custom_call.1} parent=1 // pred_check_branch
      %26 = sbr.rel (0) target = $region21
    $region20: #{tpu_custom_call.1} parent=1 // pred_region
      _
    $region21: #{tpu_custom_call.1} parent=1 // pred_fallthru
      _
    // Predicated region
    $region22: #{tpu_custom_call.1} parent=1 // pred_check
      _
    $region23: #{tpu_custom_call.1} parent=1 // pred_check_branch
      %28 = sbr.rel (0) target = $region25
    $region24: #{tpu_custom_call.1} parent=1 // pred_region
      _
    $region25: #{tpu_custom_call.1} parent=1 // pred_fallthru
      _
    // Predicated region
    $region26: #{tpu_custom_call.1} parent=1 // pred_check
      _
    $region27: #{tpu_custom_call.1} parent=1 // pred_check_branch
      %30 = sbr.rel (0) target = $region29
    $region28: #{tpu_custom_call.1} parent=1 // pred_region
      _
    $region29: #{tpu_custom_call.1} parent=1 // pred_fallthru
      _
    // Predicated region
    $region30: #{tpu_custom_call.1} parent=1 // pred_check
      _
    $region31: #{tpu_custom_call.1} parent=1 // pred_check_branch
      %32 = sbr.rel (0) target = $region33
    $region32: #{tpu_custom_call.1} parent=1 // pred_region
      _
    $region33: #{tpu_custom_call.1} parent=1 // pred_fallthru
      _
    // Predicated region
    $region34: #{tpu_custom_call.1} parent=1 // pred_check
      _
    $region35: #{tpu_custom_call.1} parent=1 // pred_check_branch
      %34 = sbr.rel (0) target = $region37
    $region36: #{tpu_custom_call.1} parent=1 // pred_region
      _
    $region37: #{tpu_custom_call.1} parent=1 // pred_fallthru
      _
    %v35 = vlaneseq
    %v36 = vand.u32 %v35, 127
    loop: start=0, step=1, limit=10
    $region38: #{tpu_custom_call.1} parent=1 // loop_pre_header
      _
    $region39: #{tpu_custom_call.1} parent=1 // loop_header
      %s38 = sphi 0, %s42
      %p39 = scmp.ge.s32.totalorder %s38, 10
      %v43 = vphi 0.0, %v2267
    $region40: #{tpu_custom_call.1} parent=1 // loop_header_branch
      %41 = sbr.rel (%p39) target = $region44
    $region41: #{tpu_custom_call.1} parent=1 // loop_body
      %s44 = smul.u32 %s38, 128
      %s45 = scalar_lea.vmem %s2, %s44
      %v46 = vld [vmem:[%s45] sm:$0xff]
      %v47 = vld [vmem:[%s45 + $0x8] sm:$0xff]
      %v48 = vld [vmem:[%s45 + $0x10] sm:$0xff]
      %v49 = vld [vmem:[%s45 + $0x18] sm:$0xff]
      %v50 = vld [vmem:[%s45 + $0x20] sm:$0xff]
      %v51 = vld [vmem:[%s45 + $0x28] sm:$0xff]
      %v52 = vld [vmem:[%s45 + $0x30] sm:$0xff]
      %v53 = vld [vmem:[%s45 + $0x38] sm:$0xff]
      %v54 = vld [vmem:[%s45 + $0x40] sm:$0xff]
      %v55 = vld [vmem:[%s45 + $0x48] sm:$0xff]
      %v56 = vld [vmem:[%s45 + $0x50] sm:$0xff]
      %v57 = vld [vmem:[%s45 + $0x58] sm:$0xff]
      %v58 = vld [vmem:[%s45 + $0x60] sm:$0xff]
      %v59 = vld [vmem:[%s45 + $0x68] sm:$0xff]
      %v60 = vld [vmem:[%s45 + $0x70] sm:$0xff]
      %v61 = vld [vmem:[%s45 + $0x78] sm:$0xff]
      %s62 = scalar_lea.vmem %s3, %s44
      %v63 = vld [vmem:[%s62] sm:$0xff]
      %v64 = vld [vmem:[%s62 + $0x8] sm:$0xff]
      %v65 = vld [vmem:[%s62 + $0x10] sm:$0xff]
      %v66 = vld [vmem:[%s62 + $0x18] sm:$0xff]
      %v67 = vld [vmem:[%s62 + $0x20] sm:$0xff]
      %v68 = vld [vmem:[%s62 + $0x28] sm:$0xff]
      %v69 = vld [vmem:[%s62 + $0x30] sm:$0xff]
      %v70 = vld [vmem:[%s62 + $0x38] sm:$0xff]
      %v71 = vld [vmem:[%s62 + $0x40] sm:$0xff]
      %v72 = vld [vmem:[%s62 + $0x48] sm:$0xff]
      %v73 = vld [vmem:[%s62 + $0x50] sm:$0xff]
      %v74 = vld [vmem:[%s62 + $0x58] sm:$0xff]
      %v75 = vld [vmem:[%s62 + $0x60] sm:$0xff]
      %v76 = vld [vmem:[%s62 + $0x68] sm:$0xff]
      %v77 = vld [vmem:[%s62 + $0x70] sm:$0xff]
      %v78 = vld [vmem:[%s62 + $0x78] sm:$0xff]
      %s79 = scalar_lea.vmem %s6, %s44
      %v80 = vld [vmem:[%s79] sm:$0xff]
      %v81 = vld [vmem:[%s79 + $0x8] sm:$0xff]
      %v82 = vld [vmem:[%s79 + $0x10] sm:$0xff]
      %v83 = vld [vmem:[%s79 + $0x18] sm:$0xff]
      %v84 = vld [vmem:[%s79 + $0x20] sm:$0xff]
      %v85 = vld [vmem:[%s79 + $0x28] sm:$0xff]
      %v86 = vld [vmem:[%s79 + $0x30] sm:$0xff]
      %v87 = vld [vmem:[%s79 + $0x38] sm:$0xff]
      %v88 = vld [vmem:[%s79 + $0x40] sm:$0xff]
      %v89 = vld [vmem:[%s79 + $0x48] sm:$0xff]
      %v90 = vld [vmem:[%s79 + $0x50] sm:$0xff]
      %v91 = vld [vmem:[%s79 + $0x58] sm:$0xff]
      %v92 = vld [vmem:[%s79 + $0x60] sm:$0xff]
      %v93 = vld [vmem:[%s79 + $0x68] sm:$0xff]
      %v94 = vld [vmem:[%s79 + $0x70] sm:$0xff]
      %v95 = vld [vmem:[%s79 + $0x78] sm:$0xff]
      %s96 = scalar_lea.vmem %s4, %s44
      %v97 = vld [vmem:[%s96] sm:$0xff]
      %v98 = vld [vmem:[%s96 + $0x8] sm:$0xff]
      %v99 = vld [vmem:[%s96 + $0x10] sm:$0xff]
      %v100 = vld [vmem:[%s96 + $0x18] sm:$0xff]
      %v101 = vld [vmem:[%s96 + $0x20] sm:$0xff]
      %v102 = vld [vmem:[%s96 + $0x28] sm:$0xff]
      %v103 = vld [vmem:[%s96 + $0x30] sm:$0xff]
      %v104 = vld [vmem:[%s96 + $0x38] sm:$0xff]
      %v105 = vld [vmem:[%s96 + $0x40] sm:$0xff]
      %v106 = vld [vmem:[%s96 + $0x48] sm:$0xff]
      %v107 = vld [vmem:[%s96 + $0x50] sm:$0xff]
      %v108 = vld [vmem:[%s96 + $0x58] sm:$0xff]
      %v109 = vld [vmem:[%s96 + $0x60] sm:$0xff]
      %v110 = vld [vmem:[%s96 + $0x68] sm:$0xff]
      %v111 = vld [vmem:[%s96 + $0x70] sm:$0xff]
      %v112 = vld [vmem:[%s96 + $0x78] sm:$0xff]
      %s113 = scalar_lea.vmem %s5, %s44
      %v114 = vld [vmem:[%s113] sm:$0xff]
      %v115 = vld [vmem:[%s113 + $0x8] sm:$0xff]
      %v116 = vld [vmem:[%s113 + $0x10] sm:$0xff]
      %v117 = vld [vmem:[%s113 + $0x18] sm:$0xff]
      %v118 = vld [vmem:[%s113 + $0x20] sm:$0xff]
      %v119 = vld [vmem:[%s113 + $0x28] sm:$0xff]
      %v120 = vld [vmem:[%s113 + $0x30] sm:$0xff]
      %v121 = vld [vmem:[%s113 + $0x38] sm:$0xff]
      %v122 = vld [vmem:[%s113 + $0x40] sm:$0xff]
      %v123 = vld [vmem:[%s113 + $0x48] sm:$0xff]
      %v124 = vld [vmem:[%s113 + $0x50] sm:$0xff]
      %v125 = vld [vmem:[%s113 + $0x58] sm:$0xff]
      %v126 = vld [vmem:[%s113 + $0x60] sm:$0xff]
      %v127 = vld [vmem:[%s113 + $0x68] sm:$0xff]
      %v128 = vld [vmem:[%s113 + $0x70] sm:$0xff]
      %v129 = vld [vmem:[%s113 + $0x78] sm:$0xff]
      %s130 = scalar_lea.vmem %s7, %s44
      %v131 = vld [vmem:[%s130] sm:$0xff]
      %v132 = vld [vmem:[%s130 + $0x8] sm:$0xff]
      %v133 = vld [vmem:[%s130 + $0x10] sm:$0xff]
      %v134 = vld [vmem:[%s130 + $0x18] sm:$0xff]
      %v135 = vld [vmem:[%s130 + $0x20] sm:$0xff]
      %v136 = vld [vmem:[%s130 + $0x28] sm:$0xff]
      %v137 = vld [vmem:[%s130 + $0x30] sm:$0xff]
      %v138 = vld [vmem:[%s130 + $0x38] sm:$0xff]
      %v139 = vld [vmem:[%s130 + $0x40] sm:$0xff]
      %v140 = vld [vmem:[%s130 + $0x48] sm:$0xff]
      %v141 = vld [vmem:[%s130 + $0x50] sm:$0xff]
      %v142 = vld [vmem:[%s130 + $0x58] sm:$0xff]
      %v143 = vld [vmem:[%s130 + $0x60] sm:$0xff]
      %v144 = vld [vmem:[%s130 + $0x68] sm:$0xff]
      %v145 = vld [vmem:[%s130 + $0x70] sm:$0xff]
      %v146 = vld [vmem:[%s130 + $0x78] sm:$0xff]
      %v147 = vld [vmem:[%s0] sm:$0x77]
      %v148 = vld [vmem:[%s1] sm:$0x77]
      %150 = vset.pattern.permute.xlu0 0
      %151 = vperm.xlu0 %150, %v46
      %v152 = vpop.permute.xlu0 %151
      %155 = vset.pattern.permute.xlu0 0
      %156 = vperm.xlu0 %155, %v47
      %v157 = vpop.permute.xlu0 %156
      %160 = vset.pattern.permute.xlu0 0
      %161 = vperm.xlu0 %160, %v48
      %v162 = vpop.permute.xlu0 %161
      %165 = vset.pattern.permute.xlu0 0
      %166 = vperm.xlu0 %165, %v49
      %v167 = vpop.permute.xlu0 %166
      %170 = vset.pattern.permute.xlu0 0
      %171 = vperm.xlu0 %170, %v50
      %v172 = vpop.permute.xlu0 %171
      %175 = vset.pattern.permute.xlu0 0
      %176 = vperm.xlu0 %175, %v51
      %v177 = vpop.permute.xlu0 %176
      %180 = vset.pattern.permute.xlu0 0
      %181 = vperm.xlu0 %180, %v52
      %v182 = vpop.permute.xlu0 %181
      %185 = vset.pattern.permute.xlu0 0
      %186 = vperm.xlu0 %185, %v53
      %v187 = vpop.permute.xlu0 %186
      %190 = vset.pattern.permute.xlu0 0
      %191 = vperm.xlu0 %190, %v54
      %v192 = vpop.permute.xlu0 %191
      %195 = vset.pattern.permute.xlu0 0
      %196 = vperm.xlu0 %195, %v55
      %v197 = vpop.permute.xlu0 %196
      %200 = vset.pattern.permute.xlu0 0
      %201 = vperm.xlu0 %200, %v56
      %v202 = vpop.permute.xlu0 %201
      %205 = vset.pattern.permute.xlu0 0
      %206 = vperm.xlu0 %205, %v57
      %v207 = vpop.permute.xlu0 %206
      %210 = vset.pattern.permute.xlu0 0
      %211 = vperm.xlu0 %210, %v58
      %v212 = vpop.permute.xlu0 %211
      %215 = vset.pattern.permute.xlu0 0
      %216 = vperm.xlu0 %215, %v59
      %v217 = vpop.permute.xlu0 %216
      %220 = vset.pattern.permute.xlu0 0
      %221 = vperm.xlu0 %220, %v60
      %v222 = vpop.permute.xlu0 %221
      %225 = vset.pattern.permute.xlu0 0
      %226 = vperm.xlu0 %225, %v61
      %v227 = vpop.permute.xlu0 %226
      %v230 = vlaneseq
      %v231 = vshrl.u32 %v230, 7
      %v232 = vsub.s32 0, %v231
      %v233 = vrot.slane %v147, %v232
      %v234 = vlaneseq
      %v235 = vshrl.u32 %v234, 7
      %v236 = vsub.s32 4, %v235
      %v237 = vrot.slane %v147, %v236
      %v240 = vlaneseq
      %v241 = vshrl.u32 %v240, 7
      %v242 = vsub.s32 0, %v241
      %v243 = vrot.slane %v233, %v242
      %v244 = vlaneseq
      %v245 = vshrl.u32 %v244, 7
      %v246 = vsub.s32 0, %v245
      %v247 = vrot.slane %v237, %v246
      %v248 = vmul.f32 %v152, %v243
      %v249 = vmul.f32 %v152, %v247
      %v250 = vmul.f32 %v157, %v243
      %v251 = vmul.f32 %v157, %v247
      %v252 = vmul.f32 %v162, %v243
      %v253 = vmul.f32 %v162, %v247
      %v254 = vmul.f32 %v167, %v243
      %v255 = vmul.f32 %v167, %v247
      %v256 = vmul.f32 %v172, %v243
      %v257 = vmul.f32 %v172, %v247
      %v258 = vmul.f32 %v177, %v243
      %v259 = vmul.f32 %v177, %v247
      %v260 = vmul.f32 %v182, %v243
      %v261 = vmul.f32 %v182, %v247
      %v262 = vmul.f32 %v187, %v243
      %v263 = vmul.f32 %v187, %v247
      %v264 = vmul.f32 %v192, %v243
      %v265 = vmul.f32 %v192, %v247
      %v266 = vmul.f32 %v197, %v243
      %v267 = vmul.f32 %v197, %v247
      %v268 = vmul.f32 %v202, %v243
      %v269 = vmul.f32 %v202, %v247
      %v270 = vmul.f32 %v207, %v243
      %v271 = vmul.f32 %v207, %v247
      %v272 = vmul.f32 %v212, %v243
      %v273 = vmul.f32 %v212, %v247
      %v274 = vmul.f32 %v217, %v243
      %v275 = vmul.f32 %v217, %v247
      %v276 = vmul.f32 %v222, %v243
      %v277 = vmul.f32 %v222, %v247
      %v278 = vmul.f32 %v227, %v243
      %v279 = vmul.f32 %v227, %v247
      %281 = vset.pattern.permute.xlu0 0
      %282 = vperm.xlu0 %281, %v63
      %v283 = vpop.permute.xlu0 %282
      %286 = vset.pattern.permute.xlu0 0
      %287 = vperm.xlu0 %286, %v64
      %v288 = vpop.permute.xlu0 %287
      %291 = vset.pattern.permute.xlu0 0
      %292 = vperm.xlu0 %291, %v65
      %v293 = vpop.permute.xlu0 %292
      %296 = vset.pattern.permute.xlu0 0
      %297 = vperm.xlu0 %296, %v66
      %v298 = vpop.permute.xlu0 %297
      %301 = vset.pattern.permute.xlu0 0
      %302 = vperm.xlu0 %301, %v67
      %v303 = vpop.permute.xlu0 %302
      %306 = vset.pattern.permute.xlu0 0
      %307 = vperm.xlu0 %306, %v68
      %v308 = vpop.permute.xlu0 %307
      %311 = vset.pattern.permute.xlu0 0
      %312 = vperm.xlu0 %311, %v69
      %v313 = vpop.permute.xlu0 %312
      %316 = vset.pattern.permute.xlu0 0
      %317 = vperm.xlu0 %316, %v70
      %v318 = vpop.permute.xlu0 %317
      %321 = vset.pattern.permute.xlu0 0
      %322 = vperm.xlu0 %321, %v71
      %v323 = vpop.permute.xlu0 %322
      %326 = vset.pattern.permute.xlu0 0
      %327 = vperm.xlu0 %326, %v72
      %v328 = vpop.permute.xlu0 %327
      %331 = vset.pattern.permute.xlu0 0
      %332 = vperm.xlu0 %331, %v73
      %v333 = vpop.permute.xlu0 %332
      %336 = vset.pattern.permute.xlu0 0
      %337 = vperm.xlu0 %336, %v74
      %v338 = vpop.permute.xlu0 %337
      %341 = vset.pattern.permute.xlu0 0
      %342 = vperm.xlu0 %341, %v75
      %v343 = vpop.permute.xlu0 %342
      %346 = vset.pattern.permute.xlu0 0
      %347 = vperm.xlu0 %346, %v76
      %v348 = vpop.permute.xlu0 %347
      %351 = vset.pattern.permute.xlu0 0
      %352 = vperm.xlu0 %351, %v77
      %v353 = vpop.permute.xlu0 %352
      %356 = vset.pattern.permute.xlu0 0
      %357 = vperm.xlu0 %356, %v78
      %v358 = vpop.permute.xlu0 %357
      %v360 = vadd.f32 %v283, %v248
      %v361 = vadd.f32 %v283, %v249
      %v362 = vadd.f32 %v288, %v250
      %v363 = vadd.f32 %v288, %v251
      %v364 = vadd.f32 %v293, %v252
      %v365 = vadd.f32 %v293, %v253
      %v366 = vadd.f32 %v298, %v254
      %v367 = vadd.f32 %v298, %v255
      %v368 = vadd.f32 %v303, %v256
      %v369 = vadd.f32 %v303, %v257
      %v370 = vadd.f32 %v308, %v258
      %v371 = vadd.f32 %v308, %v259
      %v372 = vadd.f32 %v313, %v260
      %v373 = vadd.f32 %v313, %v261
      %v374 = vadd.f32 %v318, %v262
      %v375 = vadd.f32 %v318, %v263
      %v376 = vadd.f32 %v323, %v264
      %v377 = vadd.f32 %v323, %v265
      %v378 = vadd.f32 %v328, %v266
      %v379 = vadd.f32 %v328, %v267
      %v380 = vadd.f32 %v333, %v268
      %v381 = vadd.f32 %v333, %v269
      %v382 = vadd.f32 %v338, %v270
      %v383 = vadd.f32 %v338, %v271
      %v384 = vadd.f32 %v343, %v272
      %v385 = vadd.f32 %v343, %v273
      %v386 = vadd.f32 %v348, %v274
      %v387 = vadd.f32 %v348, %v275
      %v388 = vadd.f32 %v353, %v276
      %v389 = vadd.f32 %v353, %v277
      %v390 = vadd.f32 %v358, %v278
      %v391 = vadd.f32 %v358, %v279
      %392 = vset.pattern.permute.xlu0 1
      %393 = vperm.xlu0 %392, %v46
      %v394 = vpop.permute.xlu0 %393
      %396 = vset.pattern.permute.xlu0 1
      %397 = vperm.xlu0 %396, %v47
      %v398 = vpop.permute.xlu0 %397
      %400 = vset.pattern.permute.xlu0 1
      %401 = vperm.xlu0 %400, %v48
      %v402 = vpop.permute.xlu0 %401
      %404 = vset.pattern.permute.xlu0 1
      %405 = vperm.xlu0 %404, %v49
      %v406 = vpop.permute.xlu0 %405
      %408 = vset.pattern.permute.xlu0 1
      %409 = vperm.xlu0 %408, %v50
      %v410 = vpop.permute.xlu0 %409
      %412 = vset.pattern.permute.xlu0 1
      %413 = vperm.xlu0 %412, %v51
      %v414 = vpop.permute.xlu0 %413
      %416 = vset.pattern.permute.xlu0 1
      %417 = vperm.xlu0 %416, %v52
      %v418 = vpop.permute.xlu0 %417
      %420 = vset.pattern.permute.xlu0 1
      %421 = vperm.xlu0 %420, %v53
      %v422 = vpop.permute.xlu0 %421
      %424 = vset.pattern.permute.xlu0 1
      %425 = vperm.xlu0 %424, %v54
      %v426 = vpop.permute.xlu0 %425
      %428 = vset.pattern.permute.xlu0 1
      %429 = vperm.xlu0 %428, %v55
      %v430 = vpop.permute.xlu0 %429
      %432 = vset.pattern.permute.xlu0 1
      %433 = vperm.xlu0 %432, %v56
      %v434 = vpop.permute.xlu0 %433
      %436 = vset.pattern.permute.xlu0 1
      %437 = vperm.xlu0 %436, %v57
      %v438 = vpop.permute.xlu0 %437
      %440 = vset.pattern.permute.xlu0 1
      %441 = vperm.xlu0 %440, %v58
      %v442 = vpop.permute.xlu0 %441
      %444 = vset.pattern.permute.xlu0 1
      %445 = vperm.xlu0 %444, %v59
      %v446 = vpop.permute.xlu0 %445
      %448 = vset.pattern.permute.xlu0 1
      %449 = vperm.xlu0 %448, %v60
      %v450 = vpop.permute.xlu0 %449
      %452 = vset.pattern.permute.xlu0 1
      %453 = vperm.xlu0 %452, %v61
      %v454 = vpop.permute.xlu0 %453
      %v456 = vlaneseq
      %v457 = vshrl.u32 %v456, 7
      %v458 = vsub.s32 1, %v457
      %v459 = vrot.slane %v147, %v458
      %v460 = vlaneseq
      %v461 = vshrl.u32 %v460, 7
      %v462 = vsub.s32 5, %v461
      %v463 = vrot.slane %v147, %v462
      %v466 = vlaneseq
      %v467 = vshrl.u32 %v466, 7
      %v468 = vsub.s32 1, %v467
      %v469 = vrot.slane %v459, %v468
      %v470 = vlaneseq
      %v471 = vshrl.u32 %v470, 7
      %v472 = vsub.s32 1, %v471
      %v473 = vrot.slane %v463, %v472
      %v474 = vmul.f32 %v394, %v469
      %v475 = vmul.f32 %v394, %v473
      %v476 = vmul.f32 %v398, %v469
      %v477 = vmul.f32 %v398, %v473
      %v478 = vmul.f32 %v402, %v469
      %v479 = vmul.f32 %v402, %v473
      %v480 = vmul.f32 %v406, %v469
      %v481 = vmul.f32 %v406, %v473
      %v482 = vmul.f32 %v410, %v469
      %v483 = vmul.f32 %v410, %v473
      %v484 = vmul.f32 %v414, %v469
      %v485 = vmul.f32 %v414, %v473
      %v486 = vmul.f32 %v418, %v469
      %v487 = vmul.f32 %v418, %v473
      %v488 = vmul.f32 %v422, %v469
      %v489 = vmul.f32 %v422, %v473
      %v490 = vmul.f32 %v426, %v469
      %v491 = vmul.f32 %v426, %v473
      %v492 = vmul.f32 %v430, %v469
      %v493 = vmul.f32 %v430, %v473
      %v494 = vmul.f32 %v434, %v469
      %v495 = vmul.f32 %v434, %v473
      %v496 = vmul.f32 %v438, %v469
      %v497 = vmul.f32 %v438, %v473
      %v498 = vmul.f32 %v442, %v469
      %v499 = vmul.f32 %v442, %v473
      %v500 = vmul.f32 %v446, %v469
      %v501 = vmul.f32 %v446, %v473
      %v502 = vmul.f32 %v450, %v469
      %v503 = vmul.f32 %v450, %v473
      %v504 = vmul.f32 %v454, %v469
      %v505 = vmul.f32 %v454, %v473
      %v506 = vadd.f32 %v360, %v474
      %v507 = vadd.f32 %v361, %v475
      %v508 = vadd.f32 %v362, %v476
      %v509 = vadd.f32 %v363, %v477
      %v510 = vadd.f32 %v364, %v478
      %v511 = vadd.f32 %v365, %v479
      %v512 = vadd.f32 %v366, %v480
      %v513 = vadd.f32 %v367, %v481
      %v514 = vadd.f32 %v368, %v482
      %v515 = vadd.f32 %v369, %v483
      %v516 = vadd.f32 %v370, %v484
      %v517 = vadd.f32 %v371, %v485
      %v518 = vadd.f32 %v372, %v486
      %v519 = vadd.f32 %v373, %v487
      %v520 = vadd.f32 %v374, %v488
      %v521 = vadd.f32 %v375, %v489
      %v522 = vadd.f32 %v376, %v490
      %v523 = vadd.f32 %v377, %v491
      %v524 = vadd.f32 %v378, %v492
      %v525 = vadd.f32 %v379, %v493
      %v526 = vadd.f32 %v380, %v494
      %v527 = vadd.f32 %v381, %v495
      %v528 = vadd.f32 %v382, %v496
      %v529 = vadd.f32 %v383, %v497
      %v530 = vadd.f32 %v384, %v498
      %v531 = vadd.f32 %v385, %v499
      %v532 = vadd.f32 %v386, %v500
      %v533 = vadd.f32 %v387, %v501
      %v534 = vadd.f32 %v388, %v502
      %v535 = vadd.f32 %v389, %v503
      %v536 = vadd.f32 %v390, %v504
      %v537 = vadd.f32 %v391, %v505
      %538 = vset.pattern.permute.xlu0 2
      %539 = vperm.xlu0 %538, %v46
      %v540 = vpop.permute.xlu0 %539
      %542 = vset.pattern.permute.xlu0 2
      %543 = vperm.xlu0 %542, %v47
      %v544 = vpop.permute.xlu0 %543
      %546 = vset.pattern.permute.xlu0 2
      %547 = vperm.xlu0 %546, %v48
      %v548 = vpop.permute.xlu0 %547
      %550 = vset.pattern.permute.xlu0 2
      %551 = vperm.xlu0 %550, %v49
      %v552 = vpop.permute.xlu0 %551
      %554 = vset.pattern.permute.xlu0 2
      %555 = vperm.xlu0 %554, %v50
      %v556 = vpop.permute.xlu0 %555
      %558 = vset.pattern.permute.xlu0 2
      %559 = vperm.xlu0 %558, %v51
      %v560 = vpop.permute.xlu0 %559
      %562 = vset.pattern.permute.xlu0 2
      %563 = vperm.xlu0 %562, %v52
      %v564 = vpop.permute.xlu0 %563
      %566 = vset.pattern.permute.xlu0 2
      %567 = vperm.xlu0 %566, %v53
      %v568 = vpop.permute.xlu0 %567
      %570 = vset.pattern.permute.xlu0 2
      %571 = vperm.xlu0 %570, %v54
      %v572 = vpop.permute.xlu0 %571
      %574 = vset.pattern.permute.xlu0 2
      %575 = vperm.xlu0 %574, %v55
      %v576 = vpop.permute.xlu0 %575
      %578 = vset.pattern.permute.xlu0 2
      %579 = vperm.xlu0 %578, %v56
      %v580 = vpop.permute.xlu0 %579
      %582 = vset.pattern.permute.xlu0 2
      %583 = vperm.xlu0 %582, %v57
      %v584 = vpop.permute.xlu0 %583
      %586 = vset.pattern.permute.xlu0 2
      %587 = vperm.xlu0 %586, %v58
      %v588 = vpop.permute.xlu0 %587
      %590 = vset.pattern.permute.xlu0 2
      %591 = vperm.xlu0 %590, %v59
      %v592 = vpop.permute.xlu0 %591
      %594 = vset.pattern.permute.xlu0 2
      %595 = vperm.xlu0 %594, %v60
      %v596 = vpop.permute.xlu0 %595
      %598 = vset.pattern.permute.xlu0 2
      %599 = vperm.xlu0 %598, %v61
      %v600 = vpop.permute.xlu0 %599
      %v602 = vlaneseq
      %v603 = vshrl.u32 %v602, 7
      %v604 = vsub.s32 2, %v603
      %v605 = vrot.slane %v147, %v604
      %v606 = vlaneseq
      %v607 = vshrl.u32 %v606, 7
      %v608 = vsub.s32 6, %v607
      %v609 = vrot.slane %v147, %v608
      %v612 = vlaneseq
      %v613 = vshrl.u32 %v612, 7
      %v614 = vsub.s32 2, %v613
      %v615 = vrot.slane %v605, %v614
      %v616 = vlaneseq
      %v617 = vshrl.u32 %v616, 7
      %v618 = vsub.s32 2, %v617
      %v619 = vrot.slane %v609, %v618
      %v620 = vmul.f32 %v540, %v615
      %v621 = vmul.f32 %v540, %v619
      %v622 = vmul.f32 %v544, %v615
      %v623 = vmul.f32 %v544, %v619
      %v624 = vmul.f32 %v548, %v615
      %v625 = vmul.f32 %v548, %v619
      %v626 = vmul.f32 %v552, %v615
      %v627 = vmul.f32 %v552, %v619
      %v628 = vmul.f32 %v556, %v615
      %v629 = vmul.f32 %v556, %v619
      %v630 = vmul.f32 %v560, %v615
      %v631 = vmul.f32 %v560, %v619
      %v632 = vmul.f32 %v564, %v615
      %v633 = vmul.f32 %v564, %v619
      %v634 = vmul.f32 %v568, %v615
      %v635 = vmul.f32 %v568, %v619
      %v636 = vmul.f32 %v572, %v615
      %v637 = vmul.f32 %v572, %v619
      %v638 = vmul.f32 %v576, %v615
      %v639 = vmul.f32 %v576, %v619
      %v640 = vmul.f32 %v580, %v615
      %v641 = vmul.f32 %v580, %v619
      %v642 = vmul.f32 %v584, %v615
      %v643 = vmul.f32 %v584, %v619
      %v644 = vmul.f32 %v588, %v615
      %v645 = vmul.f32 %v588, %v619
      %v646 = vmul.f32 %v592, %v615
      %v647 = vmul.f32 %v592, %v619
      %v648 = vmul.f32 %v596, %v615
      %v649 = vmul.f32 %v596, %v619
      %v650 = vmul.f32 %v600, %v615
      %v651 = vmul.f32 %v600, %v619
      %v652 = vadd.f32 %v506, %v620
      %v653 = vadd.f32 %v507, %v621
      %v654 = vadd.f32 %v508, %v622
      %v655 = vadd.f32 %v509, %v623
      %v656 = vadd.f32 %v510, %v624
      %v657 = vadd.f32 %v511, %v625
      %v658 = vadd.f32 %v512, %v626
      %v659 = vadd.f32 %v513, %v627
      %v660 = vadd.f32 %v514, %v628
      %v661 = vadd.f32 %v515, %v629
      %v662 = vadd.f32 %v516, %v630
      %v663 = vadd.f32 %v517, %v631
      %v664 = vadd.f32 %v518, %v632
      %v665 = vadd.f32 %v519, %v633
      %v666 = vadd.f32 %v520, %v634
      %v667 = vadd.f32 %v521, %v635
      %v668 = vadd.f32 %v522, %v636
      %v669 = vadd.f32 %v523, %v637
      %v670 = vadd.f32 %v524, %v638
      %v671 = vadd.f32 %v525, %v639
      %v672 = vadd.f32 %v526, %v640
      %v673 = vadd.f32 %v527, %v641
      %v674 = vadd.f32 %v528, %v642
      %v675 = vadd.f32 %v529, %v643
      %v676 = vadd.f32 %v530, %v644
      %v677 = vadd.f32 %v531, %v645
      %v678 = vadd.f32 %v532, %v646
      %v679 = vadd.f32 %v533, %v647
      %v680 = vadd.f32 %v534, %v648
      %v681 = vadd.f32 %v535, %v649
      %v682 = vadd.f32 %v536, %v650
      %v683 = vadd.f32 %v537, %v651
      %v684 = vmax.f32 %v652, 0.0
      %v685 = vmax.f32 %v653, 0.0
      %v686 = vmax.f32 %v654, 0.0
      %v687 = vmax.f32 %v655, 0.0
      %v688 = vmax.f32 %v656, 0.0
      %v689 = vmax.f32 %v657, 0.0
      %v690 = vmax.f32 %v658, 0.0
      %v691 = vmax.f32 %v659, 0.0
      %v692 = vmax.f32 %v660, 0.0
      %v693 = vmax.f32 %v661, 0.0
      %v694 = vmax.f32 %v662, 0.0
      %v695 = vmax.f32 %v663, 0.0
      %v696 = vmax.f32 %v664, 0.0
      %v697 = vmax.f32 %v665, 0.0
      %v698 = vmax.f32 %v666, 0.0
      %v699 = vmax.f32 %v667, 0.0
      %v700 = vmax.f32 %v668, 0.0
      %v701 = vmax.f32 %v669, 0.0
      %v702 = vmax.f32 %v670, 0.0
      %v703 = vmax.f32 %v671, 0.0
      %v704 = vmax.f32 %v672, 0.0
      %v705 = vmax.f32 %v673, 0.0
      %v706 = vmax.f32 %v674, 0.0
      %v707 = vmax.f32 %v675, 0.0
      %v708 = vmax.f32 %v676, 0.0
      %v709 = vmax.f32 %v677, 0.0
      %v710 = vmax.f32 %v678, 0.0
      %v711 = vmax.f32 %v679, 0.0
      %v712 = vmax.f32 %v680, 0.0
      %v713 = vmax.f32 %v681, 0.0
      %v714 = vmax.f32 %v682, 0.0
      %v715 = vmax.f32 %v683, 0.0
      %v716 = vadd.f32 %v684, %v685
      %717 = vadd.xlane.f32.xlu0 %v716
      %v718 = vpop.xlane.xlu0 %717
      %v719 = vadd.f32 %v686, %v687
      %720 = vadd.xlane.f32.xlu0 %v719
      %v721 = vpop.xlane.xlu0 %720
      %v722 = vadd.f32 %v688, %v689
      %723 = vadd.xlane.f32.xlu0 %v722
      %v724 = vpop.xlane.xlu0 %723
      %v725 = vadd.f32 %v690, %v691
      %726 = vadd.xlane.f32.xlu0 %v725
      %v727 = vpop.xlane.xlu0 %726
      %v728 = vadd.f32 %v692, %v693
      %729 = vadd.xlane.f32.xlu0 %v728
      %v730 = vpop.xlane.xlu0 %729
      %v731 = vadd.f32 %v694, %v695
      %732 = vadd.xlane.f32.xlu0 %v731
      %v733 = vpop.xlane.xlu0 %732
      %v734 = vadd.f32 %v696, %v697
      %735 = vadd.xlane.f32.xlu0 %v734
      %v736 = vpop.xlane.xlu0 %735
      %v737 = vadd.f32 %v698, %v699
      %738 = vadd.xlane.f32.xlu0 %v737
      %v739 = vpop.xlane.xlu0 %738
      %v740 = vadd.f32 %v700, %v701
      %741 = vadd.xlane.f32.xlu0 %v740
      %v742 = vpop.xlane.xlu0 %741
      %v743 = vadd.f32 %v702, %v703
      %744 = vadd.xlane.f32.xlu0 %v743
      %v745 = vpop.xlane.xlu0 %744
      %v746 = vadd.f32 %v704, %v705
      %747 = vadd.xlane.f32.xlu0 %v746
      %v748 = vpop.xlane.xlu0 %747
      %v749 = vadd.f32 %v706, %v707
      %750 = vadd.xlane.f32.xlu0 %v749
      %v751 = vpop.xlane.xlu0 %750
      %v752 = vadd.f32 %v708, %v709
      %753 = vadd.xlane.f32.xlu0 %v752
      %v754 = vpop.xlane.xlu0 %753
      %v755 = vadd.f32 %v710, %v711
      %756 = vadd.xlane.f32.xlu0 %v755
      %v757 = vpop.xlane.xlu0 %756
      %v758 = vadd.f32 %v712, %v713
      %759 = vadd.xlane.f32.xlu0 %v758
      %v760 = vpop.xlane.xlu0 %759
      %v761 = vadd.f32 %v714, %v715
      %762 = vadd.xlane.f32.xlu0 %v761
      %v763 = vpop.xlane.xlu0 %762
      %v764 = vmul.f32 %v718, %v80
      %v765 = vmul.f32 %v721, %v81
      %v766 = vmul.f32 %v724, %v82
      %v767 = vmul.f32 %v727, %v83
      %v768 = vmul.f32 %v730, %v84
      %v769 = vmul.f32 %v733, %v85
      %v770 = vmul.f32 %v736, %v86
      %v771 = vmul.f32 %v739, %v87
      %v772 = vmul.f32 %v742, %v88
      %v773 = vmul.f32 %v745, %v89
      %v774 = vmul.f32 %v748, %v90
      %v775 = vmul.f32 %v751, %v91
      %v776 = vmul.f32 %v754, %v92
      %v777 = vmul.f32 %v757, %v93
      %v778 = vmul.f32 %v760, %v94
      %v779 = vmul.f32 %v763, %v95
      %vm780 = vcmask 7168
      %v781 = vsel %vm780, %v764, 0.0
      %v782 = vsel %vm780, %v765, 0.0
      %v783 = vadd.f32 %v781, %v782
      %v784 = vsel %vm780, %v766, 0.0
      %v785 = vadd.f32 %v783, %v784
      %v786 = vsel %vm780, %v767, 0.0
      %v787 = vadd.f32 %v785, %v786
      %v788 = vsel %vm780, %v768, 0.0
      %v789 = vadd.f32 %v787, %v788
      %v790 = vsel %vm780, %v769, 0.0
      %v791 = vadd.f32 %v789, %v790
      %v792 = vsel %vm780, %v770, 0.0
      %v793 = vadd.f32 %v791, %v792
      %v794 = vsel %vm780, %v771, 0.0
      %v795 = vadd.f32 %v793, %v794
      %v796 = vsel %vm780, %v772, 0.0
      %v797 = vadd.f32 %v795, %v796
      %v798 = vsel %vm780, %v773, 0.0
      %v799 = vadd.f32 %v797, %v798
      %v800 = vsel %vm780, %v774, 0.0
      %v801 = vadd.f32 %v799, %v800
      %v802 = vsel %vm780, %v775, 0.0
      %v803 = vadd.f32 %v801, %v802
      %v804 = vsel %vm780, %v776, 0.0
      %v805 = vadd.f32 %v803, %v804
      %v806 = vsel %vm780, %v777, 0.0
      %v807 = vadd.f32 %v805, %v806
      %v808 = vsel %vm780, %v778, 0.0
      %v809 = vadd.f32 %v807, %v808
      %v810 = vsel %vm780, %v779, 0.0
      %v811 = vadd.f32 %v809, %v810
      %v812 = vrot.slane %v811, 4
      %v813 = vadd.f32 %v811, %v812
      %v814 = vrot.slane %v813, 2
      %v815 = vadd.f32 %v813, %v814
      %v816 = vrot.slane %v815, 1
      %v817 = vadd.f32 %v815, %v816
      %819 = vset.pattern.permute.xlu0 0
      %820 = vperm.xlu0 %819, %v97
      %v821 = vpop.permute.xlu0 %820
      %824 = vset.pattern.permute.xlu0 0
      %825 = vperm.xlu0 %824, %v98
      %v826 = vpop.permute.xlu0 %825
      %829 = vset.pattern.permute.xlu0 0
      %830 = vperm.xlu0 %829, %v99
      %v831 = vpop.permute.xlu0 %830
      %834 = vset.pattern.permute.xlu0 0
      %835 = vperm.xlu0 %834, %v100
      %v836 = vpop.permute.xlu0 %835
      %839 = vset.pattern.permute.xlu0 0
      %840 = vperm.xlu0 %839, %v101
      %v841 = vpop.permute.xlu0 %840
      %844 = vset.pattern.permute.xlu0 0
      %845 = vperm.xlu0 %844, %v102
      %v846 = vpop.permute.xlu0 %845
      %849 = vset.pattern.permute.xlu0 0
      %850 = vperm.xlu0 %849, %v103
      %v851 = vpop.permute.xlu0 %850
      %854 = vset.pattern.permute.xlu0 0
      %855 = vperm.xlu0 %854, %v104
      %v856 = vpop.permute.xlu0 %855
      %859 = vset.pattern.permute.xlu0 0
      %860 = vperm.xlu0 %859, %v105
      %v861 = vpop.permute.xlu0 %860
      %864 = vset.pattern.permute.xlu0 0
      %865 = vperm.xlu0 %864, %v106
      %v866 = vpop.permute.xlu0 %865
      %869 = vset.pattern.permute.xlu0 0
      %870 = vperm.xlu0 %869, %v107
      %v871 = vpop.permute.xlu0 %870
      %874 = vset.pattern.permute.xlu0 0
      %875 = vperm.xlu0 %874, %v108
      %v876 = vpop.permute.xlu0 %875
      %879 = vset.pattern.permute.xlu0 0
      %880 = vperm.xlu0 %879, %v109
      %v881 = vpop.permute.xlu0 %880
      %884 = vset.pattern.permute.xlu0 0
      %885 = vperm.xlu0 %884, %v110
      %v886 = vpop.permute.xlu0 %885
      %889 = vset.pattern.permute.xlu0 0
      %890 = vperm.xlu0 %889, %v111
      %v891 = vpop.permute.xlu0 %890
      %894 = vset.pattern.permute.xlu0 0
      %895 = vperm.xlu0 %894, %v112
      %v896 = vpop.permute.xlu0 %895
      %v899 = vlaneseq
      %v900 = vshrl.u32 %v899, 7
      %v901 = vsub.s32 0, %v900
      %v902 = vrot.slane %v148, %v901
      %v903 = vlaneseq
      %v904 = vshrl.u32 %v903, 7
      %v905 = vsub.s32 4, %v904
      %v906 = vrot.slane %v148, %v905
      %v909 = vlaneseq
      %v910 = vshrl.u32 %v909, 7
      %v911 = vsub.s32 0, %v910
      %v912 = vrot.slane %v902, %v911
      %v913 = vlaneseq
      %v914 = vshrl.u32 %v913, 7
      %v915 = vsub.s32 0, %v914
      %v916 = vrot.slane %v906, %v915
      %v917 = vmul.f32 %v821, %v912
      %v918 = vmul.f32 %v821, %v916
      %v919 = vmul.f32 %v826, %v912
      %v920 = vmul.f32 %v826, %v916
      %v921 = vmul.f32 %v831, %v912
      %v922 = vmul.f32 %v831, %v916
      %v923 = vmul.f32 %v836, %v912
      %v924 = vmul.f32 %v836, %v916
      %v925 = vmul.f32 %v841, %v912
      %v926 = vmul.f32 %v841, %v916
      %v927 = vmul.f32 %v846, %v912
      %v928 = vmul.f32 %v846, %v916
      %v929 = vmul.f32 %v851, %v912
      %v930 = vmul.f32 %v851, %v916
      %v931 = vmul.f32 %v856, %v912
      %v932 = vmul.f32 %v856, %v916
      %v933 = vmul.f32 %v861, %v912
      %v934 = vmul.f32 %v861, %v916
      %v935 = vmul.f32 %v866, %v912
      %v936 = vmul.f32 %v866, %v916
      %v937 = vmul.f32 %v871, %v912
      %v938 = vmul.f32 %v871, %v916
      %v939 = vmul.f32 %v876, %v912
      %v940 = vmul.f32 %v876, %v916
      %v941 = vmul.f32 %v881, %v912
      %v942 = vmul.f32 %v881, %v916
      %v943 = vmul.f32 %v886, %v912
      %v944 = vmul.f32 %v886, %v916
      %v945 = vmul.f32 %v891, %v912
      %v946 = vmul.f32 %v891, %v916
      %v947 = vmul.f32 %v896, %v912
      %v948 = vmul.f32 %v896, %v916
      %950 = vset.pattern.permute.xlu0 0
      %951 = vperm.xlu0 %950, %v114
      %v952 = vpop.permute.xlu0 %951
      %955 = vset.pattern.permute.xlu0 0
      %956 = vperm.xlu0 %955, %v115
      %v957 = vpop.permute.xlu0 %956
      %960 = vset.pattern.permute.xlu0 0
      %961 = vperm.xlu0 %960, %v116
      %v962 = vpop.permute.xlu0 %961
      %965 = vset.pattern.permute.xlu0 0
      %966 = vperm.xlu0 %965, %v117
      %v967 = vpop.permute.xlu0 %966
      %970 = vset.pattern.permute.xlu0 0
      %971 = vperm.xlu0 %970, %v118
      %v972 = vpop.permute.xlu0 %971
      %975 = vset.pattern.permute.xlu0 0
      %976 = vperm.xlu0 %975, %v119
      %v977 = vpop.permute.xlu0 %976
      %980 = vset.pattern.permute.xlu0 0
      %981 = vperm.xlu0 %980, %v120
      %v982 = vpop.permute.xlu0 %981
      %985 = vset.pattern.permute.xlu0 0
      %986 = vperm.xlu0 %985, %v121
      %v987 = vpop.permute.xlu0 %986
      %990 = vset.pattern.permute.xlu0 0
      %991 = vperm.xlu0 %990, %v122
      %v992 = vpop.permute.xlu0 %991
      %995 = vset.pattern.permute.xlu0 0
      %996 = vperm.xlu0 %995, %v123
      %v997 = vpop.permute.xlu0 %996
      %1000 = vset.pattern.permute.xlu0 0
      %1001 = vperm.xlu0 %1000, %v124
      %v1002 = vpop.permute.xlu0 %1001
      %1005 = vset.pattern.permute.xlu0 0
      %1006 = vperm.xlu0 %1005, %v125
      %v1007 = vpop.permute.xlu0 %1006
      %1010 = vset.pattern.permute.xlu0 0
      %1011 = vperm.xlu0 %1010, %v126
      %v1012 = vpop.permute.xlu0 %1011
      %1015 = vset.pattern.permute.xlu0 0
      %1016 = vperm.xlu0 %1015, %v127
      %v1017 = vpop.permute.xlu0 %1016
      %1020 = vset.pattern.permute.xlu0 0
      %1021 = vperm.xlu0 %1020, %v128
      %v1022 = vpop.permute.xlu0 %1021
      %1025 = vset.pattern.permute.xlu0 0
      %1026 = vperm.xlu0 %1025, %v129
      %v1027 = vpop.permute.xlu0 %1026
      %v1029 = vadd.f32 %v952, %v917
      %v1030 = vadd.f32 %v952, %v918
      %v1031 = vadd.f32 %v957, %v919
      %v1032 = vadd.f32 %v957, %v920
      %v1033 = vadd.f32 %v962, %v921
      %v1034 = vadd.f32 %v962, %v922
      %v1035 = vadd.f32 %v967, %v923
      %v1036 = vadd.f32 %v967, %v924
      %v1037 = vadd.f32 %v972, %v925
      %v1038 = vadd.f32 %v972, %v926
      %v1039 = vadd.f32 %v977, %v927
      %v1040 = vadd.f32 %v977, %v928
      %v1041 = vadd.f32 %v982, %v929
      %v1042 = vadd.f32 %v982, %v930
      %v1043 = vadd.f32 %v987, %v931
      %v1044 = vadd.f32 %v987, %v932
      %v1045 = vadd.f32 %v992, %v933
      %v1046 = vadd.f32 %v992, %v934
      %v1047 = vadd.f32 %v997, %v935
      %v1048 = vadd.f32 %v997, %v936
      %v1049 = vadd.f32 %v1002, %v937
      %v1050 = vadd.f32 %v1002, %v938
      %v1051 = vadd.f32 %v1007, %v939
      %v1052 = vadd.f32 %v1007, %v940
      %v1053 = vadd.f32 %v1012, %v941
      %v1054 = vadd.f32 %v1012, %v942
      %v1055 = vadd.f32 %v1017, %v943
      %v1056 = vadd.f32 %v1017, %v944
      %v1057 = vadd.f32 %v1022, %v945
      %v1058 = vadd.f32 %v1022, %v946
      %v1059 = vadd.f32 %v1027, %v947
      %v1060 = vadd.f32 %v1027, %v948
      %1061 = vset.pattern.permute.xlu0 1
      %1062 = vperm.xlu0 %1061, %v97
      %v1063 = vpop.permute.xlu0 %1062
      %1065 = vset.pattern.permute.xlu0 1
      %1066 = vperm.xlu0 %1065, %v98
      %v1067 = vpop.permute.xlu0 %1066
      %1069 = vset.pattern.permute.xlu0 1
      %1070 = vperm.xlu0 %1069, %v99
      %v1071 = vpop.permute.xlu0 %1070
      %1073 = vset.pattern.permute.xlu0 1
      %1074 = vperm.xlu0 %1073, %v100
      %v1075 = vpop.permute.xlu0 %1074
      %1077 = vset.pattern.permute.xlu0 1
      %1078 = vperm.xlu0 %1077, %v101
      %v1079 = vpop.permute.xlu0 %1078
      %1081 = vset.pattern.permute.xlu0 1
      %1082 = vperm.xlu0 %1081, %v102
      %v1083 = vpop.permute.xlu0 %1082
      %1085 = vset.pattern.permute.xlu0 1
      %1086 = vperm.xlu0 %1085, %v103
      %v1087 = vpop.permute.xlu0 %1086
      %1089 = vset.pattern.permute.xlu0 1
      %1090 = vperm.xlu0 %1089, %v104
      %v1091 = vpop.permute.xlu0 %1090
      %1093 = vset.pattern.permute.xlu0 1
      %1094 = vperm.xlu0 %1093, %v105
      %v1095 = vpop.permute.xlu0 %1094
      %1097 = vset.pattern.permute.xlu0 1
      %1098 = vperm.xlu0 %1097, %v106
      %v1099 = vpop.permute.xlu0 %1098
      %1101 = vset.pattern.permute.xlu0 1
      %1102 = vperm.xlu0 %1101, %v107
      %v1103 = vpop.permute.xlu0 %1102
      %1105 = vset.pattern.permute.xlu0 1
      %1106 = vperm.xlu0 %1105, %v108
      %v1107 = vpop.permute.xlu0 %1106
      %1109 = vset.pattern.permute.xlu0 1
      %1110 = vperm.xlu0 %1109, %v109
      %v1111 = vpop.permute.xlu0 %1110
      %1113 = vset.pattern.permute.xlu0 1
      %1114 = vperm.xlu0 %1113, %v110
      %v1115 = vpop.permute.xlu0 %1114
      %1117 = vset.pattern.permute.xlu0 1
      %1118 = vperm.xlu0 %1117, %v111
      %v1119 = vpop.permute.xlu0 %1118
      %1121 = vset.pattern.permute.xlu0 1
      %1122 = vperm.xlu0 %1121, %v112
      %v1123 = vpop.permute.xlu0 %1122
      %v1125 = vlaneseq
      %v1126 = vshrl.u32 %v1125, 7
      %v1127 = vsub.s32 1, %v1126
      %v1128 = vrot.slane %v148, %v1127
      %v1129 = vlaneseq
      %v1130 = vshrl.u32 %v1129, 7
      %v1131 = vsub.s32 5, %v1130
      %v1132 = vrot.slane %v148, %v1131
      %v1135 = vlaneseq
      %v1136 = vshrl.u32 %v1135, 7
      %v1137 = vsub.s32 1, %v1136
      %v1138 = vrot.slane %v1128, %v1137
      %v1139 = vlaneseq
      %v1140 = vshrl.u32 %v1139, 7
      %v1141 = vsub.s32 1, %v1140
      %v1142 = vrot.slane %v1132, %v1141
      %v1143 = vmul.f32 %v1063, %v1138
      %v1144 = vmul.f32 %v1063, %v1142
      %v1145 = vmul.f32 %v1067, %v1138
      %v1146 = vmul.f32 %v1067, %v1142
      %v1147 = vmul.f32 %v1071, %v1138
      %v1148 = vmul.f32 %v1071, %v1142
      %v1149 = vmul.f32 %v1075, %v1138
      %v1150 = vmul.f32 %v1075, %v1142
      %v1151 = vmul.f32 %v1079, %v1138
      %v1152 = vmul.f32 %v1079, %v1142
      %v1153 = vmul.f32 %v1083, %v1138
      %v1154 = vmul.f32 %v1083, %v1142
      %v1155 = vmul.f32 %v1087, %v1138
      %v1156 = vmul.f32 %v1087, %v1142
      %v1157 = vmul.f32 %v1091, %v1138
      %v1158 = vmul.f32 %v1091, %v1142
      %v1159 = vmul.f32 %v1095, %v1138
      %v1160 = vmul.f32 %v1095, %v1142
      %v1161 = vmul.f32 %v1099, %v1138
      %v1162 = vmul.f32 %v1099, %v1142
      %v1163 = vmul.f32 %v1103, %v1138
      %v1164 = vmul.f32 %v1103, %v1142
      %v1165 = vmul.f32 %v1107, %v1138
      %v1166 = vmul.f32 %v1107, %v1142
      %v1167 = vmul.f32 %v1111, %v1138
      %v1168 = vmul.f32 %v1111, %v1142
      %v1169 = vmul.f32 %v1115, %v1138
      %v1170 = vmul.f32 %v1115, %v1142
      %v1171 = vmul.f32 %v1119, %v1138
      %v1172 = vmul.f32 %v1119, %v1142
      %v1173 = vmul.f32 %v1123, %v1138
      %v1174 = vmul.f32 %v1123, %v1142
      %v1175 = vadd.f32 %v1029, %v1143
      %v1176 = vadd.f32 %v1030, %v1144
      %v1177 = vadd.f32 %v1031, %v1145
      %v1178 = vadd.f32 %v1032, %v1146
      %v1179 = vadd.f32 %v1033, %v1147
      %v1180 = vadd.f32 %v1034, %v1148
      %v1181 = vadd.f32 %v1035, %v1149
      %v1182 = vadd.f32 %v1036, %v1150
      %v1183 = vadd.f32 %v1037, %v1151
      %v1184 = vadd.f32 %v1038, %v1152
      %v1185 = vadd.f32 %v1039, %v1153
      %v1186 = vadd.f32 %v1040, %v1154
      %v1187 = vadd.f32 %v1041, %v1155
      %v1188 = vadd.f32 %v1042, %v1156
      %v1189 = vadd.f32 %v1043, %v1157
      %v1190 = vadd.f32 %v1044, %v1158
      %v1191 = vadd.f32 %v1045, %v1159
      %v1192 = vadd.f32 %v1046, %v1160
      %v1193 = vadd.f32 %v1047, %v1161
      %v1194 = vadd.f32 %v1048, %v1162
      %v1195 = vadd.f32 %v1049, %v1163
      %v1196 = vadd.f32 %v1050, %v1164
      %v1197 = vadd.f32 %v1051, %v1165
      %v1198 = vadd.f32 %v1052, %v1166
      %v1199 = vadd.f32 %v1053, %v1167
      %v1200 = vadd.f32 %v1054, %v1168
      %v1201 = vadd.f32 %v1055, %v1169
      %v1202 = vadd.f32 %v1056, %v1170
      %v1203 = vadd.f32 %v1057, %v1171
      %v1204 = vadd.f32 %v1058, %v1172
      %v1205 = vadd.f32 %v1059, %v1173
      %v1206 = vadd.f32 %v1060, %v1174
      %1207 = vset.pattern.permute.xlu0 2
      %1208 = vperm.xlu0 %1207, %v97
      %v1209 = vpop.permute.xlu0 %1208
      %1211 = vset.pattern.permute.xlu0 2
      %1212 = vperm.xlu0 %1211, %v98
      %v1213 = vpop.permute.xlu0 %1212
      %1215 = vset.pattern.permute.xlu0 2
      %1216 = vperm.xlu0 %1215, %v99
      %v1217 = vpop.permute.xlu0 %1216
      %1219 = vset.pattern.permute.xlu0 2
      %1220 = vperm.xlu0 %1219, %v100
      %v1221 = vpop.permute.xlu0 %1220
      %1223 = vset.pattern.permute.xlu0 2
      %1224 = vperm.xlu0 %1223, %v101
      %v1225 = vpop.permute.xlu0 %1224
      %1227 = vset.pattern.permute.xlu0 2
      %1228 = vperm.xlu0 %1227, %v102
      %v1229 = vpop.permute.xlu0 %1228
      %1231 = vset.pattern.permute.xlu0 2
      %1232 = vperm.xlu0 %1231, %v103
      %v1233 = vpop.permute.xlu0 %1232
      %1235 = vset.pattern.permute.xlu0 2
      %1236 = vperm.xlu0 %1235, %v104
      %v1237 = vpop.permute.xlu0 %1236
      %1239 = vset.pattern.permute.xlu0 2
      %1240 = vperm.xlu0 %1239, %v105
      %v1241 = vpop.permute.xlu0 %1240
      %1243 = vset.pattern.permute.xlu0 2
      %1244 = vperm.xlu0 %1243, %v106
      %v1245 = vpop.permute.xlu0 %1244
      %1247 = vset.pattern.permute.xlu0 2
      %1248 = vperm.xlu0 %1247, %v107
      %v1249 = vpop.permute.xlu0 %1248
      %1251 = vset.pattern.permute.xlu0 2
      %1252 = vperm.xlu0 %1251, %v108
      %v1253 = vpop.permute.xlu0 %1252
      %1255 = vset.pattern.permute.xlu0 2
      %1256 = vperm.xlu0 %1255, %v109
      %v1257 = vpop.permute.xlu0 %1256
      %1259 = vset.pattern.permute.xlu0 2
      %1260 = vperm.xlu0 %1259, %v110
      %v1261 = vpop.permute.xlu0 %1260
      %1263 = vset.pattern.permute.xlu0 2
      %1264 = vperm.xlu0 %1263, %v111
      %v1265 = vpop.permute.xlu0 %1264
      %1267 = vset.pattern.permute.xlu0 2
      %1268 = vperm.xlu0 %1267, %v112
      %v1269 = vpop.permute.xlu0 %1268
      %v1271 = vlaneseq
      %v1272 = vshrl.u32 %v1271, 7
      %v1273 = vsub.s32 2, %v1272
      %v1274 = vrot.slane %v148, %v1273
      %v1275 = vlaneseq
      %v1276 = vshrl.u32 %v1275, 7
      %v1277 = vsub.s32 6, %v1276
      %v1278 = vrot.slane %v148, %v1277
      %v1281 = vlaneseq
      %v1282 = vshrl.u32 %v1281, 7
      %v1283 = vsub.s32 2, %v1282
      %v1284 = vrot.slane %v1274, %v1283
      %v1285 = vlaneseq
      %v1286 = vshrl.u32 %v1285, 7
      %v1287 = vsub.s32 2, %v1286
      %v1288 = vrot.slane %v1278, %v1287
      %v1289 = vmul.f32 %v1209, %v1284
      %v1290 = vmul.f32 %v1209, %v1288
      %v1291 = vmul.f32 %v1213, %v1284
      %v1292 = vmul.f32 %v1213, %v1288
      %v1293 = vmul.f32 %v1217, %v1284
      %v1294 = vmul.f32 %v1217, %v1288
      %v1295 = vmul.f32 %v1221, %v1284
      %v1296 = vmul.f32 %v1221, %v1288
      %v1297 = vmul.f32 %v1225, %v1284
      %v1298 = vmul.f32 %v1225, %v1288
      %v1299 = vmul.f32 %v1229, %v1284
      %v1300 = vmul.f32 %v1229, %v1288
      %v1301 = vmul.f32 %v1233, %v1284
      %v1302 = vmul.f32 %v1233, %v1288
      %v1303 = vmul.f32 %v1237, %v1284
      %v1304 = vmul.f32 %v1237, %v1288
      %v1305 = vmul.f32 %v1241, %v1284
      %v1306 = vmul.f32 %v1241, %v1288
      %v1307 = vmul.f32 %v1245, %v1284
      %v1308 = vmul.f32 %v1245, %v1288
      %v1309 = vmul.f32 %v1249, %v1284
      %v1310 = vmul.f32 %v1249, %v1288
      %v1311 = vmul.f32 %v1253, %v1284
      %v1312 = vmul.f32 %v1253, %v1288
      %v1313 = vmul.f32 %v1257, %v1284
      %v1314 = vmul.f32 %v1257, %v1288
      %v1315 = vmul.f32 %v1261, %v1284
      %v1316 = vmul.f32 %v1261, %v1288
      %v1317 = vmul.f32 %v1265, %v1284
      %v1318 = vmul.f32 %v1265, %v1288
      %v1319 = vmul.f32 %v1269, %v1284
      %v1320 = vmul.f32 %v1269, %v1288
      %v1321 = vadd.f32 %v1175, %v1289
      %v1322 = vadd.f32 %v1176, %v1290
      %v1323 = vadd.f32 %v1177, %v1291
      %v1324 = vadd.f32 %v1178, %v1292
      %v1325 = vadd.f32 %v1179, %v1293
      %v1326 = vadd.f32 %v1180, %v1294
      %v1327 = vadd.f32 %v1181, %v1295
      %v1328 = vadd.f32 %v1182, %v1296
      %v1329 = vadd.f32 %v1183, %v1297
      %v1330 = vadd.f32 %v1184, %v1298
      %v1331 = vadd.f32 %v1185, %v1299
      %v1332 = vadd.f32 %v1186, %v1300
      %v1333 = vadd.f32 %v1187, %v1301
      %v1334 = vadd.f32 %v1188, %v1302
      %v1335 = vadd.f32 %v1189, %v1303
      %v1336 = vadd.f32 %v1190, %v1304
      %v1337 = vadd.f32 %v1191, %v1305
      %v1338 = vadd.f32 %v1192, %v1306
      %v1339 = vadd.f32 %v1193, %v1307
      %v1340 = vadd.f32 %v1194, %v1308
      %v1341 = vadd.f32 %v1195, %v1309
      %v1342 = vadd.f32 %v1196, %v1310
      %v1343 = vadd.f32 %v1197, %v1311
      %v1344 = vadd.f32 %v1198, %v1312
      %v1345 = vadd.f32 %v1199, %v1313
      %v1346 = vadd.f32 %v1200, %v1314
      %v1347 = vadd.f32 %v1201, %v1315
      %v1348 = vadd.f32 %v1202, %v1316
      %v1349 = vadd.f32 %v1203, %v1317
      %v1350 = vadd.f32 %v1204, %v1318
      %v1351 = vadd.f32 %v1205, %v1319
      %v1352 = vadd.f32 %v1206, %v1320
      %v1353 = vmax.f32 %v1321, 0.0
      %v1354 = vmax.f32 %v1322, 0.0
      %v1355 = vmax.f32 %v1323, 0.0
      %v1356 = vmax.f32 %v1324, 0.0
      %v1357 = vmax.f32 %v1325, 0.0
      %v1358 = vmax.f32 %v1326, 0.0
      %v1359 = vmax.f32 %v1327, 0.0
      %v1360 = vmax.f32 %v1328, 0.0
      %v1361 = vmax.f32 %v1329, 0.0
      %v1362 = vmax.f32 %v1330, 0.0
      %v1363 = vmax.f32 %v1331, 0.0
      %v1364 = vmax.f32 %v1332, 0.0
      %v1365 = vmax.f32 %v1333, 0.0
      %v1366 = vmax.f32 %v1334, 0.0
      %v1367 = vmax.f32 %v1335, 0.0
      %v1368 = vmax.f32 %v1336, 0.0
      %v1369 = vmax.f32 %v1337, 0.0
      %v1370 = vmax.f32 %v1338, 0.0
      %v1371 = vmax.f32 %v1339, 0.0
      %v1372 = vmax.f32 %v1340, 0.0
      %v1373 = vmax.f32 %v1341, 0.0
      %v1374 = vmax.f32 %v1342, 0.0
      %v1375 = vmax.f32 %v1343, 0.0
      %v1376 = vmax.f32 %v1344, 0.0
      %v1377 = vmax.f32 %v1345, 0.0
      %v1378 = vmax.f32 %v1346, 0.0
      %v1379 = vmax.f32 %v1347, 0.0
      %v1380 = vmax.f32 %v1348, 0.0
      %v1381 = vmax.f32 %v1349, 0.0
      %v1382 = vmax.f32 %v1350, 0.0
      %v1383 = vmax.f32 %v1351, 0.0
      %v1384 = vmax.f32 %v1352, 0.0
      %v1385 = vadd.f32 %v1353, %v1354
      %1386 = vadd.xlane.f32.xlu0 %v1385
      %v1387 = vpop.xlane.xlu0 %1386
      %v1388 = vadd.f32 %v1355, %v1356
      %1389 = vadd.xlane.f32.xlu0 %v1388
      %v1390 = vpop.xlane.xlu0 %1389
      %v1391 = vadd.f32 %v1357, %v1358
      %1392 = vadd.xlane.f32.xlu0 %v1391
      %v1393 = vpop.xlane.xlu0 %1392
      %v1394 = vadd.f32 %v1359, %v1360
      %1395 = vadd.xlane.f32.xlu0 %v1394
      %v1396 = vpop.xlane.xlu0 %1395
      %v1397 = vadd.f32 %v1361, %v1362
      %1398 = vadd.xlane.f32.xlu0 %v1397
      %v1399 = vpop.xlane.xlu0 %1398
      %v1400 = vadd.f32 %v1363, %v1364
      %1401 = vadd.xlane.f32.xlu0 %v1400
      %v1402 = vpop.xlane.xlu0 %1401
      %v1403 = vadd.f32 %v1365, %v1366
      %1404 = vadd.xlane.f32.xlu0 %v1403
      %v1405 = vpop.xlane.xlu0 %1404
      %v1406 = vadd.f32 %v1367, %v1368
      %1407 = vadd.xlane.f32.xlu0 %v1406
      %v1408 = vpop.xlane.xlu0 %1407
      %v1409 = vadd.f32 %v1369, %v1370
      %1410 = vadd.xlane.f32.xlu0 %v1409
      %v1411 = vpop.xlane.xlu0 %1410
      %v1412 = vadd.f32 %v1371, %v1372
      %1413 = vadd.xlane.f32.xlu0 %v1412
      %v1414 = vpop.xlane.xlu0 %1413
      %v1415 = vadd.f32 %v1373, %v1374
      %1416 = vadd.xlane.f32.xlu0 %v1415
      %v1417 = vpop.xlane.xlu0 %1416
      %v1418 = vadd.f32 %v1375, %v1376
      %1419 = vadd.xlane.f32.xlu0 %v1418
      %v1420 = vpop.xlane.xlu0 %1419
      %v1421 = vadd.f32 %v1377, %v1378
      %1422 = vadd.xlane.f32.xlu0 %v1421
      %v1423 = vpop.xlane.xlu0 %1422
      %v1424 = vadd.f32 %v1379, %v1380
      %1425 = vadd.xlane.f32.xlu0 %v1424
      %v1426 = vpop.xlane.xlu0 %1425
      %v1427 = vadd.f32 %v1381, %v1382
      %1428 = vadd.xlane.f32.xlu0 %v1427
      %v1429 = vpop.xlane.xlu0 %1428
      %v1430 = vadd.f32 %v1383, %v1384
      %1431 = vadd.xlane.f32.xlu0 %v1430
      %v1432 = vpop.xlane.xlu0 %1431
      %v1433 = vmul.f32 %v1387, %v131
      %v1434 = vmul.f32 %v1390, %v132
      %v1435 = vmul.f32 %v1393, %v133
      %v1436 = vmul.f32 %v1396, %v134
      %v1437 = vmul.f32 %v1399, %v135
      %v1438 = vmul.f32 %v1402, %v136
      %v1439 = vmul.f32 %v1405, %v137
      %v1440 = vmul.f32 %v1408, %v138
      %v1441 = vmul.f32 %v1411, %v139
      %v1442 = vmul.f32 %v1414, %v140
      %v1443 = vmul.f32 %v1417, %v141
      %v1444 = vmul.f32 %v1420, %v142
      %v1445 = vmul.f32 %v1423, %v143
      %v1446 = vmul.f32 %v1426, %v144
      %v1447 = vmul.f32 %v1429, %v145
      %v1448 = vmul.f32 %v1432, %v146
      %v1449 = vsel %vm780, %v1433, 0.0
      %v1450 = vsel %vm780, %v1434, 0.0
      %v1451 = vadd.f32 %v1449, %v1450
      %v1452 = vsel %vm780, %v1435, 0.0
      %v1453 = vadd.f32 %v1451, %v1452
      %v1454 = vsel %vm780, %v1436, 0.0
      %v1455 = vadd.f32 %v1453, %v1454
      %v1456 = vsel %vm780, %v1437, 0.0
      %v1457 = vadd.f32 %v1455, %v1456
      %v1458 = vsel %vm780, %v1438, 0.0
      %v1459 = vadd.f32 %v1457, %v1458
      %v1460 = vsel %vm780, %v1439, 0.0
      %v1461 = vadd.f32 %v1459, %v1460
      %v1462 = vsel %vm780, %v1440, 0.0
      %v1463 = vadd.f32 %v1461, %v1462
      %v1464 = vsel %vm780, %v1441, 0.0
      %v1465 = vadd.f32 %v1463, %v1464
      %v1466 = vsel %vm780, %v1442, 0.0
      %v1467 = vadd.f32 %v1465, %v1466
      %v1468 = vsel %vm780, %v1443, 0.0
      %v1469 = vadd.f32 %v1467, %v1468
      %v1470 = vsel %vm780, %v1444, 0.0
      %v1471 = vadd.f32 %v1469, %v1470
      %v1472 = vsel %vm780, %v1445, 0.0
      %v1473 = vadd.f32 %v1471, %v1472
      %v1474 = vsel %vm780, %v1446, 0.0
      %v1475 = vadd.f32 %v1473, %v1474
      %v1476 = vsel %vm780, %v1447, 0.0
      %v1477 = vadd.f32 %v1475, %v1476
      %v1478 = vsel %vm780, %v1448, 0.0
      %v1479 = vadd.f32 %v1477, %v1478
      %v1480 = vrot.slane %v1479, 4
      %v1481 = vadd.f32 %v1479, %v1480
      %v1482 = vrot.slane %v1481, 2
      %v1483 = vadd.f32 %v1481, %v1482
      %v1484 = vrot.slane %v1483, 1
      %v1485 = vadd.f32 %v1483, %v1484
      %v1486 = vadd.f32 %v817, %v1485
      %vm1487 = vcmp.eq.s32.totalorder %v36, 0
      %1489 = vset.pattern.permute.xlu0 0
      %1490 = vperm.xlu0 %1489, %v1486
      %v1491 = vpop.permute.xlu0 %1490
      %v1493 = vsel %vm1487, %v1491, 0.0
      %v1494 = vadd.f32 %v43, %v1493
      %s1495 = scalar_lea.vmem %s0, 8
      %v1496 = vld [vmem:[%s1495] sm:$0x77]
      %s1497 = scalar_lea.vmem %s1, 8
      %v1498 = vld [vmem:[%s1497] sm:$0x77]
      %v1500 = vlaneseq
      %v1501 = vshrl.u32 %v1500, 7
      %v1502 = vsub.s32 0, %v1501
      %v1503 = vrot.slane %v1496, %v1502
      %v1504 = vlaneseq
      %v1505 = vshrl.u32 %v1504, 7
      %v1506 = vsub.s32 4, %v1505
      %v1507 = vrot.slane %v1496, %v1506
      %v1510 = vlaneseq
      %v1511 = vshrl.u32 %v1510, 7
      %v1512 = vsub.s32 0, %v1511
      %v1513 = vrot.slane %v1503, %v1512
      %v1514 = vlaneseq
      %v1515 = vshrl.u32 %v1514, 7
      %v1516 = vsub.s32 0, %v1515
      %v1517 = vrot.slane %v1507, %v1516
      %v1518 = vmul.f32 %v152, %v1513
      %v1519 = vmul.f32 %v152, %v1517
      %v1520 = vmul.f32 %v157, %v1513
      %v1521 = vmul.f32 %v157, %v1517
      %v1522 = vmul.f32 %v162, %v1513
      %v1523 = vmul.f32 %v162, %v1517
      %v1524 = vmul.f32 %v167, %v1513
      %v1525 = vmul.f32 %v167, %v1517
      %v1526 = vmul.f32 %v172, %v1513
      %v1527 = vmul.f32 %v172, %v1517
      %v1528 = vmul.f32 %v177, %v1513
      %v1529 = vmul.f32 %v177, %v1517
      %v1530 = vmul.f32 %v182, %v1513
      %v1531 = vmul.f32 %v182, %v1517
      %v1532 = vmul.f32 %v187, %v1513
      %v1533 = vmul.f32 %v187, %v1517
      %v1534 = vmul.f32 %v192, %v1513
      %v1535 = vmul.f32 %v192, %v1517
      %v1536 = vmul.f32 %v197, %v1513
      %v1537 = vmul.f32 %v197, %v1517
      %v1538 = vmul.f32 %v202, %v1513
      %v1539 = vmul.f32 %v202, %v1517
      %v1540 = vmul.f32 %v207, %v1513
      %v1541 = vmul.f32 %v207, %v1517
      %v1542 = vmul.f32 %v212, %v1513
      %v1543 = vmul.f32 %v212, %v1517
      %v1544 = vmul.f32 %v217, %v1513
      %v1545 = vmul.f32 %v217, %v1517
      %v1546 = vmul.f32 %v222, %v1513
      %v1547 = vmul.f32 %v222, %v1517
      %v1548 = vmul.f32 %v227, %v1513
      %v1549 = vmul.f32 %v227, %v1517
      %v1550 = vadd.f32 %v283, %v1518
      %v1551 = vadd.f32 %v283, %v1519
      %v1552 = vadd.f32 %v288, %v1520
      %v1553 = vadd.f32 %v288, %v1521
      %v1554 = vadd.f32 %v293, %v1522
      %v1555 = vadd.f32 %v293, %v1523
      %v1556 = vadd.f32 %v298, %v1524
      %v1557 = vadd.f32 %v298, %v1525
      %v1558 = vadd.f32 %v303, %v1526
      %v1559 = vadd.f32 %v303, %v1527
      %v1560 = vadd.f32 %v308, %v1528
      %v1561 = vadd.f32 %v308, %v1529
      %v1562 = vadd.f32 %v313, %v1530
      %v1563 = vadd.f32 %v313, %v1531
      %v1564 = vadd.f32 %v318, %v1532
      %v1565 = vadd.f32 %v318, %v1533
      %v1566 = vadd.f32 %v323, %v1534
      %v1567 = vadd.f32 %v323, %v1535
      %v1568 = vadd.f32 %v328, %v1536
      %v1569 = vadd.f32 %v328, %v1537
      %v1570 = vadd.f32 %v333, %v1538
      %v1571 = vadd.f32 %v333, %v1539
      %v1572 = vadd.f32 %v338, %v1540
      %v1573 = vadd.f32 %v338, %v1541
      %v1574 = vadd.f32 %v343, %v1542
      %v1575 = vadd.f32 %v343, %v1543
      %v1576 = vadd.f32 %v348, %v1544
      %v1577 = vadd.f32 %v348, %v1545
      %v1578 = vadd.f32 %v353, %v1546
      %v1579 = vadd.f32 %v353, %v1547
      %v1580 = vadd.f32 %v358, %v1548
      %v1581 = vadd.f32 %v358, %v1549
      %v1582 = vlaneseq
      %v1583 = vshrl.u32 %v1582, 7
      %v1584 = vsub.s32 1, %v1583
      %v1585 = vrot.slane %v1496, %v1584
      %v1586 = vlaneseq
      %v1587 = vshrl.u32 %v1586, 7
      %v1588 = vsub.s32 5, %v1587
      %v1589 = vrot.slane %v1496, %v1588
      %v1592 = vlaneseq
      %v1593 = vshrl.u32 %v1592, 7
      %v1594 = vsub.s32 1, %v1593
      %v1595 = vrot.slane %v1585, %v1594
      %v1596 = vlaneseq
      %v1597 = vshrl.u32 %v1596, 7
      %v1598 = vsub.s32 1, %v1597
      %v1599 = vrot.slane %v1589, %v1598
      %v1600 = vmul.f32 %v394, %v1595
      %v1601 = vmul.f32 %v394, %v1599
      %v1602 = vmul.f32 %v398, %v1595
      %v1603 = vmul.f32 %v398, %v1599
      %v1604 = vmul.f32 %v402, %v1595
      %v1605 = vmul.f32 %v402, %v1599
      %v1606 = vmul.f32 %v406, %v1595
      %v1607 = vmul.f32 %v406, %v1599
      %v1608 = vmul.f32 %v410, %v1595
      %v1609 = vmul.f32 %v410, %v1599
      %v1610 = vmul.f32 %v414, %v1595
      %v1611 = vmul.f32 %v414, %v1599
      %v1612 = vmul.f32 %v418, %v1595
      %v1613 = vmul.f32 %v418, %v1599
      %v1614 = vmul.f32 %v422, %v1595
      %v1615 = vmul.f32 %v422, %v1599
      %v1616 = vmul.f32 %v426, %v1595
      %v1617 = vmul.f32 %v426, %v1599
      %v1618 = vmul.f32 %v430, %v1595
      %v1619 = vmul.f32 %v430, %v1599
      %v1620 = vmul.f32 %v434, %v1595
      %v1621 = vmul.f32 %v434, %v1599
      %v1622 = vmul.f32 %v438, %v1595
      %v1623 = vmul.f32 %v438, %v1599
      %v1624 = vmul.f32 %v442, %v1595
      %v1625 = vmul.f32 %v442, %v1599
      %v1626 = vmul.f32 %v446, %v1595
      %v1627 = vmul.f32 %v446, %v1599
      %v1628 = vmul.f32 %v450, %v1595
      %v1629 = vmul.f32 %v450, %v1599
      %v1630 = vmul.f32 %v454, %v1595
      %v1631 = vmul.f32 %v454, %v1599
      %v1632 = vadd.f32 %v1550, %v1600
      %v1633 = vadd.f32 %v1551, %v1601
      %v1634 = vadd.f32 %v1552, %v1602
      %v1635 = vadd.f32 %v1553, %v1603
      %v1636 = vadd.f32 %v1554, %v1604
      %v1637 = vadd.f32 %v1555, %v1605
      %v1638 = vadd.f32 %v1556, %v1606
      %v1639 = vadd.f32 %v1557, %v1607
      %v1640 = vadd.f32 %v1558, %v1608
      %v1641 = vadd.f32 %v1559, %v1609
      %v1642 = vadd.f32 %v1560, %v1610
      %v1643 = vadd.f32 %v1561, %v1611
      %v1644 = vadd.f32 %v1562, %v1612
      %v1645 = vadd.f32 %v1563, %v1613
      %v1646 = vadd.f32 %v1564, %v1614
      %v1647 = vadd.f32 %v1565, %v1615
      %v1648 = vadd.f32 %v1566, %v1616
      %v1649 = vadd.f32 %v1567, %v1617
      %v1650 = vadd.f32 %v1568, %v1618
      %v1651 = vadd.f32 %v1569, %v1619
      %v1652 = vadd.f32 %v1570, %v1620
      %v1653 = vadd.f32 %v1571, %v1621
      %v1654 = vadd.f32 %v1572, %v1622
      %v1655 = vadd.f32 %v1573, %v1623
      %v1656 = vadd.f32 %v1574, %v1624
      %v1657 = vadd.f32 %v1575, %v1625
      %v1658 = vadd.f32 %v1576, %v1626
      %v1659 = vadd.f32 %v1577, %v1627
      %v1660 = vadd.f32 %v1578, %v1628
      %v1661 = vadd.f32 %v1579, %v1629
      %v1662 = vadd.f32 %v1580, %v1630
      %v1663 = vadd.f32 %v1581, %v1631
      %v1664 = vlaneseq
      %v1665 = vshrl.u32 %v1664, 7
      %v1666 = vsub.s32 2, %v1665
      %v1667 = vrot.slane %v1496, %v1666
      %v1668 = vlaneseq
      %v1669 = vshrl.u32 %v1668, 7
      %v1670 = vsub.s32 6, %v1669
      %v1671 = vrot.slane %v1496, %v1670
      %v1674 = vlaneseq
      %v1675 = vshrl.u32 %v1674, 7
      %v1676 = vsub.s32 2, %v1675
      %v1677 = vrot.slane %v1667, %v1676
      %v1678 = vlaneseq
      %v1679 = vshrl.u32 %v1678, 7
      %v1680 = vsub.s32 2, %v1679
      %v1681 = vrot.slane %v1671, %v1680
      %v1682 = vmul.f32 %v540, %v1677
      %v1683 = vmul.f32 %v540, %v1681
      %v1684 = vmul.f32 %v544, %v1677
      %v1685 = vmul.f32 %v544, %v1681
      %v1686 = vmul.f32 %v548, %v1677
      %v1687 = vmul.f32 %v548, %v1681
      %v1688 = vmul.f32 %v552, %v1677
      %v1689 = vmul.f32 %v552, %v1681
      %v1690 = vmul.f32 %v556, %v1677
      %v1691 = vmul.f32 %v556, %v1681
      %v1692 = vmul.f32 %v560, %v1677
      %v1693 = vmul.f32 %v560, %v1681
      %v1694 = vmul.f32 %v564, %v1677
      %v1695 = vmul.f32 %v564, %v1681
      %v1696 = vmul.f32 %v568, %v1677
      %v1697 = vmul.f32 %v568, %v1681
      %v1698 = vmul.f32 %v572, %v1677
      %v1699 = vmul.f32 %v572, %v1681
      %v1700 = vmul.f32 %v576, %v1677
      %v1701 = vmul.f32 %v576, %v1681
      %v1702 = vmul.f32 %v580, %v1677
      %v1703 = vmul.f32 %v580, %v1681
      %v1704 = vmul.f32 %v584, %v1677
      %v1705 = vmul.f32 %v584, %v1681
      %v1706 = vmul.f32 %v588, %v1677
      %v1707 = vmul.f32 %v588, %v1681
      %v1708 = vmul.f32 %v592, %v1677
      %v1709 = vmul.f32 %v592, %v1681
      %v1710 = vmul.f32 %v596, %v1677
      %v1711 = vmul.f32 %v596, %v1681
      %v1712 = vmul.f32 %v600, %v1677
      %v1713 = vmul.f32 %v600, %v1681
      %v1714 = vadd.f32 %v1632, %v1682
      %v1715 = vadd.f32 %v1633, %v1683
      %v1716 = vadd.f32 %v1634, %v1684
      %v1717 = vadd.f32 %v1635, %v1685
      %v1718 = vadd.f32 %v1636, %v1686
      %v1719 = vadd.f32 %v1637, %v1687
      %v1720 = vadd.f32 %v1638, %v1688
      %v1721 = vadd.f32 %v1639, %v1689
      %v1722 = vadd.f32 %v1640, %v1690
      %v1723 = vadd.f32 %v1641, %v1691
      %v1724 = vadd.f32 %v1642, %v1692
      %v1725 = vadd.f32 %v1643, %v1693
      %v1726 = vadd.f32 %v1644, %v1694
      %v1727 = vadd.f32 %v1645, %v1695
      %v1728 = vadd.f32 %v1646, %v1696
      %v1729 = vadd.f32 %v1647, %v1697
      %v1730 = vadd.f32 %v1648, %v1698
      %v1731 = vadd.f32 %v1649, %v1699
      %v1732 = vadd.f32 %v1650, %v1700
      %v1733 = vadd.f32 %v1651, %v1701
      %v1734 = vadd.f32 %v1652, %v1702
      %v1735 = vadd.f32 %v1653, %v1703
      %v1736 = vadd.f32 %v1654, %v1704
      %v1737 = vadd.f32 %v1655, %v1705
      %v1738 = vadd.f32 %v1656, %v1706
      %v1739 = vadd.f32 %v1657, %v1707
      %v1740 = vadd.f32 %v1658, %v1708
      %v1741 = vadd.f32 %v1659, %v1709
      %v1742 = vadd.f32 %v1660, %v1710
      %v1743 = vadd.f32 %v1661, %v1711
      %v1744 = vadd.f32 %v1662, %v1712
      %v1745 = vadd.f32 %v1663, %v1713
      %v1746 = vmax.f32 %v1714, 0.0
      %v1747 = vmax.f32 %v1715, 0.0
      %v1748 = vmax.f32 %v1716, 0.0
      %v1749 = vmax.f32 %v1717, 0.0
      %v1750 = vmax.f32 %v1718, 0.0
      %v1751 = vmax.f32 %v1719, 0.0
      %v1752 = vmax.f32 %v1720, 0.0
      %v1753 = vmax.f32 %v1721, 0.0
      %v1754 = vmax.f32 %v1722, 0.0
      %v1755 = vmax.f32 %v1723, 0.0
      %v1756 = vmax.f32 %v1724, 0.0
      %v1757 = vmax.f32 %v1725, 0.0
      %v1758 = vmax.f32 %v1726, 0.0
      %v1759 = vmax.f32 %v1727, 0.0
      %v1760 = vmax.f32 %v1728, 0.0
      %v1761 = vmax.f32 %v1729, 0.0
      %v1762 = vmax.f32 %v1730, 0.0
      %v1763 = vmax.f32 %v1731, 0.0
      %v1764 = vmax.f32 %v1732, 0.0
      %v1765 = vmax.f32 %v1733, 0.0
      %v1766 = vmax.f32 %v1734, 0.0
      %v1767 = vmax.f32 %v1735, 0.0
      %v1768 = vmax.f32 %v1736, 0.0
      %v1769 = vmax.f32 %v1737, 0.0
      %v1770 = vmax.f32 %v1738, 0.0
      %v1771 = vmax.f32 %v1739, 0.0
      %v1772 = vmax.f32 %v1740, 0.0
      %v1773 = vmax.f32 %v1741, 0.0
      %v1774 = vmax.f32 %v1742, 0.0
      %v1775 = vmax.f32 %v1743, 0.0
      %v1776 = vmax.f32 %v1744, 0.0
      %v1777 = vmax.f32 %v1745, 0.0
      %v1778 = vadd.f32 %v1746, %v1747
      %1779 = vadd.xlane.f32.xlu0 %v1778
      %v1780 = vpop.xlane.xlu0 %1779
      %v1781 = vadd.f32 %v1748, %v1749
      %1782 = vadd.xlane.f32.xlu0 %v1781
      %v1783 = vpop.xlane.xlu0 %1782
      %v1784 = vadd.f32 %v1750, %v1751
      %1785 = vadd.xlane.f32.xlu0 %v1784
      %v1786 = vpop.xlane.xlu0 %1785
      %v1787 = vadd.f32 %v1752, %v1753
      %1788 = vadd.xlane.f32.xlu0 %v1787
      %v1789 = vpop.xlane.xlu0 %1788
      %v1790 = vadd.f32 %v1754, %v1755
      %1791 = vadd.xlane.f32.xlu0 %v1790
      %v1792 = vpop.xlane.xlu0 %1791
      %v1793 = vadd.f32 %v1756, %v1757
      %1794 = vadd.xlane.f32.xlu0 %v1793
      %v1795 = vpop.xlane.xlu0 %1794
      %v1796 = vadd.f32 %v1758, %v1759
      %1797 = vadd.xlane.f32.xlu0 %v1796
      %v1798 = vpop.xlane.xlu0 %1797
      %v1799 = vadd.f32 %v1760, %v1761
      %1800 = vadd.xlane.f32.xlu0 %v1799
      %v1801 = vpop.xlane.xlu0 %1800
      %v1802 = vadd.f32 %v1762, %v1763
      %1803 = vadd.xlane.f32.xlu0 %v1802
      %v1804 = vpop.xlane.xlu0 %1803
      %v1805 = vadd.f32 %v1764, %v1765
      %1806 = vadd.xlane.f32.xlu0 %v1805
      %v1807 = vpop.xlane.xlu0 %1806
      %v1808 = vadd.f32 %v1766, %v1767
      %1809 = vadd.xlane.f32.xlu0 %v1808
      %v1810 = vpop.xlane.xlu0 %1809
      %v1811 = vadd.f32 %v1768, %v1769
      %1812 = vadd.xlane.f32.xlu0 %v1811
      %v1813 = vpop.xlane.xlu0 %1812
      %v1814 = vadd.f32 %v1770, %v1771
      %1815 = vadd.xlane.f32.xlu0 %v1814
      %v1816 = vpop.xlane.xlu0 %1815
      %v1817 = vadd.f32 %v1772, %v1773
      %1818 = vadd.xlane.f32.xlu0 %v1817
      %v1819 = vpop.xlane.xlu0 %1818
      %v1820 = vadd.f32 %v1774, %v1775
      %1821 = vadd.xlane.f32.xlu0 %v1820
      %v1822 = vpop.xlane.xlu0 %1821
      %v1823 = vadd.f32 %v1776, %v1777
      %1824 = vadd.xlane.f32.xlu0 %v1823
      %v1825 = vpop.xlane.xlu0 %1824
      %v1826 = vmul.f32 %v1780, %v80
      %v1827 = vmul.f32 %v1783, %v81
      %v1828 = vmul.f32 %v1786, %v82
      %v1829 = vmul.f32 %v1789, %v83
      %v1830 = vmul.f32 %v1792, %v84
      %v1831 = vmul.f32 %v1795, %v85
      %v1832 = vmul.f32 %v1798, %v86
      %v1833 = vmul.f32 %v1801, %v87
      %v1834 = vmul.f32 %v1804, %v88
      %v1835 = vmul.f32 %v1807, %v89
      %v1836 = vmul.f32 %v1810, %v90
      %v1837 = vmul.f32 %v1813, %v91
      %v1838 = vmul.f32 %v1816, %v92
      %v1839 = vmul.f32 %v1819, %v93
      %v1840 = vmul.f32 %v1822, %v94
      %v1841 = vmul.f32 %v1825, %v95
      %v1842 = vsel %vm780, %v1826, 0.0
      %v1843 = vsel %vm780, %v1827, 0.0
      %v1844 = vadd.f32 %v1842, %v1843
      %v1845 = vsel %vm780, %v1828, 0.0
      %v1846 = vadd.f32 %v1844, %v1845
      %v1847 = vsel %vm780, %v1829, 0.0
      %v1848 = vadd.f32 %v1846, %v1847
      %v1849 = vsel %vm780, %v1830, 0.0
      %v1850 = vadd.f32 %v1848, %v1849
      %v1851 = vsel %vm780, %v1831, 0.0
      %v1852 = vadd.f32 %v1850, %v1851
      %v1853 = vsel %vm780, %v1832, 0.0
      %v1854 = vadd.f32 %v1852, %v1853
      %v1855 = vsel %vm780, %v1833, 0.0
      %v1856 = vadd.f32 %v1854, %v1855
      %v1857 = vsel %vm780, %v1834, 0.0
      %v1858 = vadd.f32 %v1856, %v1857
      %v1859 = vsel %vm780, %v1835, 0.0
      %v1860 = vadd.f32 %v1858, %v1859
      %v1861 = vsel %vm780, %v1836, 0.0
      %v1862 = vadd.f32 %v1860, %v1861
      %v1863 = vsel %vm780, %v1837, 0.0
      %v1864 = vadd.f32 %v1862, %v1863
      %v1865 = vsel %vm780, %v1838, 0.0
      %v1866 = vadd.f32 %v1864, %v1865
      %v1867 = vsel %vm780, %v1839, 0.0
      %v1868 = vadd.f32 %v1866, %v1867
      %v1869 = vsel %vm780, %v1840, 0.0
      %v1870 = vadd.f32 %v1868, %v1869
      %v1871 = vsel %vm780, %v1841, 0.0
      %v1872 = vadd.f32 %v1870, %v1871
      %v1873 = vrot.slane %v1872, 4
      %v1874 = vadd.f32 %v1872, %v1873
      %v1875 = vrot.slane %v1874, 2
      %v1876 = vadd.f32 %v1874, %v1875
      %v1877 = vrot.slane %v1876, 1
      %v1878 = vadd.f32 %v1876, %v1877
      %v1880 = vlaneseq
      %v1881 = vshrl.u32 %v1880, 7
      %v1882 = vsub.s32 0, %v1881
      %v1883 = vrot.slane %v1498, %v1882
      %v1884 = vlaneseq
      %v1885 = vshrl.u32 %v1884, 7
      %v1886 = vsub.s32 4, %v1885
      %v1887 = vrot.slane %v1498, %v1886
      %v1890 = vlaneseq
      %v1891 = vshrl.u32 %v1890, 7
      %v1892 = vsub.s32 0, %v1891
      %v1893 = vrot.slane %v1883, %v1892
      %v1894 = vlaneseq
      %v1895 = vshrl.u32 %v1894, 7
      %v1896 = vsub.s32 0, %v1895
      %v1897 = vrot.slane %v1887, %v1896
      %v1898 = vmul.f32 %v821, %v1893
      %v1899 = vmul.f32 %v821, %v1897
      %v1900 = vmul.f32 %v826, %v1893
      %v1901 = vmul.f32 %v826, %v1897
      %v1902 = vmul.f32 %v831, %v1893
      %v1903 = vmul.f32 %v831, %v1897
      %v1904 = vmul.f32 %v836, %v1893
      %v1905 = vmul.f32 %v836, %v1897
      %v1906 = vmul.f32 %v841, %v1893
      %v1907 = vmul.f32 %v841, %v1897
      %v1908 = vmul.f32 %v846, %v1893
      %v1909 = vmul.f32 %v846, %v1897
      %v1910 = vmul.f32 %v851, %v1893
      %v1911 = vmul.f32 %v851, %v1897
      %v1912 = vmul.f32 %v856, %v1893
      %v1913 = vmul.f32 %v856, %v1897
      %v1914 = vmul.f32 %v861, %v1893
      %v1915 = vmul.f32 %v861, %v1897
      %v1916 = vmul.f32 %v866, %v1893
      %v1917 = vmul.f32 %v866, %v1897
      %v1918 = vmul.f32 %v871, %v1893
      %v1919 = vmul.f32 %v871, %v1897
      %v1920 = vmul.f32 %v876, %v1893
      %v1921 = vmul.f32 %v876, %v1897
      %v1922 = vmul.f32 %v881, %v1893
      %v1923 = vmul.f32 %v881, %v1897
      %v1924 = vmul.f32 %v886, %v1893
      %v1925 = vmul.f32 %v886, %v1897
      %v1926 = vmul.f32 %v891, %v1893
      %v1927 = vmul.f32 %v891, %v1897
      %v1928 = vmul.f32 %v896, %v1893
      %v1929 = vmul.f32 %v896, %v1897
      %v1930 = vadd.f32 %v952, %v1898
      %v1931 = vadd.f32 %v952, %v1899
      %v1932 = vadd.f32 %v957, %v1900
      %v1933 = vadd.f32 %v957, %v1901
      %v1934 = vadd.f32 %v962, %v1902
      %v1935 = vadd.f32 %v962, %v1903
      %v1936 = vadd.f32 %v967, %v1904
      %v1937 = vadd.f32 %v967, %v1905
      %v1938 = vadd.f32 %v972, %v1906
      %v1939 = vadd.f32 %v972, %v1907
      %v1940 = vadd.f32 %v977, %v1908
      %v1941 = vadd.f32 %v977, %v1909
      %v1942 = vadd.f32 %v982, %v1910
      %v1943 = vadd.f32 %v982, %v1911
      %v1944 = vadd.f32 %v987, %v1912
      %v1945 = vadd.f32 %v987, %v1913
      %v1946 = vadd.f32 %v992, %v1914
      %v1947 = vadd.f32 %v992, %v1915
      %v1948 = vadd.f32 %v997, %v1916
      %v1949 = vadd.f32 %v997, %v1917
      %v1950 = vadd.f32 %v1002, %v1918
      %v1951 = vadd.f32 %v1002, %v1919
      %v1952 = vadd.f32 %v1007, %v1920
      %v1953 = vadd.f32 %v1007, %v1921
      %v1954 = vadd.f32 %v1012, %v1922
      %v1955 = vadd.f32 %v1012, %v1923
      %v1956 = vadd.f32 %v1017, %v1924
      %v1957 = vadd.f32 %v1017, %v1925
      %v1958 = vadd.f32 %v1022, %v1926
      %v1959 = vadd.f32 %v1022, %v1927
      %v1960 = vadd.f32 %v1027, %v1928
      %v1961 = vadd.f32 %v1027, %v1929
      %v1962 = vlaneseq
      %v1963 = vshrl.u32 %v1962, 7
      %v1964 = vsub.s32 1, %v1963
      %v1965 = vrot.slane %v1498, %v1964
      %v1966 = vlaneseq
      %v1967 = vshrl.u32 %v1966, 7
      %v1968 = vsub.s32 5, %v1967
      %v1969 = vrot.slane %v1498, %v1968
      %v1972 = vlaneseq
      %v1973 = vshrl.u32 %v1972, 7
      %v1974 = vsub.s32 1, %v1973
      %v1975 = vrot.slane %v1965, %v1974
      %v1976 = vlaneseq
      %v1977 = vshrl.u32 %v1976, 7
      %v1978 = vsub.s32 1, %v1977
      %v1979 = vrot.slane %v1969, %v1978
      %v1980 = vmul.f32 %v1063, %v1975
      %v1981 = vmul.f32 %v1063, %v1979
      %v1982 = vmul.f32 %v1067, %v1975
      %v1983 = vmul.f32 %v1067, %v1979
      %v1984 = vmul.f32 %v1071, %v1975
      %v1985 = vmul.f32 %v1071, %v1979
      %v1986 = vmul.f32 %v1075, %v1975
      %v1987 = vmul.f32 %v1075, %v1979
      %v1988 = vmul.f32 %v1079, %v1975
      %v1989 = vmul.f32 %v1079, %v1979
      %v1990 = vmul.f32 %v1083, %v1975
      %v1991 = vmul.f32 %v1083, %v1979
      %v1992 = vmul.f32 %v1087, %v1975
      %v1993 = vmul.f32 %v1087, %v1979
      %v1994 = vmul.f32 %v1091, %v1975
      %v1995 = vmul.f32 %v1091, %v1979
      %v1996 = vmul.f32 %v1095, %v1975
      %v1997 = vmul.f32 %v1095, %v1979
      %v1998 = vmul.f32 %v1099, %v1975
      %v1999 = vmul.f32 %v1099, %v1979
      %v2000 = vmul.f32 %v1103, %v1975
      %v2001 = vmul.f32 %v1103, %v1979
      %v2002 = vmul.f32 %v1107, %v1975
      %v2003 = vmul.f32 %v1107, %v1979
      %v2004 = vmul.f32 %v1111, %v1975
      %v2005 = vmul.f32 %v1111, %v1979
      %v2006 = vmul.f32 %v1115, %v1975
      %v2007 = vmul.f32 %v1115, %v1979
      %v2008 = vmul.f32 %v1119, %v1975
      %v2009 = vmul.f32 %v1119, %v1979
      %v2010 = vmul.f32 %v1123, %v1975
      %v2011 = vmul.f32 %v1123, %v1979
      %v2012 = vadd.f32 %v1930, %v1980
      %v2013 = vadd.f32 %v1931, %v1981
      %v2014 = vadd.f32 %v1932, %v1982
      %v2015 = vadd.f32 %v1933, %v1983
      %v2016 = vadd.f32 %v1934, %v1984
      %v2017 = vadd.f32 %v1935, %v1985
      %v2018 = vadd.f32 %v1936, %v1986
      %v2019 = vadd.f32 %v1937, %v1987
      %v2020 = vadd.f32 %v1938, %v1988
      %v2021 = vadd.f32 %v1939, %v1989
      %v2022 = vadd.f32 %v1940, %v1990
      %v2023 = vadd.f32 %v1941, %v1991
      %v2024 = vadd.f32 %v1942, %v1992
      %v2025 = vadd.f32 %v1943, %v1993
      %v2026 = vadd.f32 %v1944, %v1994
      %v2027 = vadd.f32 %v1945, %v1995
      %v2028 = vadd.f32 %v1946, %v1996
      %v2029 = vadd.f32 %v1947, %v1997
      %v2030 = vadd.f32 %v1948, %v1998
      %v2031 = vadd.f32 %v1949, %v1999
      %v2032 = vadd.f32 %v1950, %v2000
      %v2033 = vadd.f32 %v1951, %v2001
      %v2034 = vadd.f32 %v1952, %v2002
      %v2035 = vadd.f32 %v1953, %v2003
      %v2036 = vadd.f32 %v1954, %v2004
      %v2037 = vadd.f32 %v1955, %v2005
      %v2038 = vadd.f32 %v1956, %v2006
      %v2039 = vadd.f32 %v1957, %v2007
      %v2040 = vadd.f32 %v1958, %v2008
      %v2041 = vadd.f32 %v1959, %v2009
      %v2042 = vadd.f32 %v1960, %v2010
      %v2043 = vadd.f32 %v1961, %v2011
      %v2044 = vlaneseq
      %v2045 = vshrl.u32 %v2044, 7
      %v2046 = vsub.s32 2, %v2045
      %v2047 = vrot.slane %v1498, %v2046
      %v2048 = vlaneseq
      %v2049 = vshrl.u32 %v2048, 7
      %v2050 = vsub.s32 6, %v2049
      %v2051 = vrot.slane %v1498, %v2050
      %v2054 = vlaneseq
      %v2055 = vshrl.u32 %v2054, 7
      %v2056 = vsub.s32 2, %v2055
      %v2057 = vrot.slane %v2047, %v2056
      %v2058 = vlaneseq
      %v2059 = vshrl.u32 %v2058, 7
      %v2060 = vsub.s32 2, %v2059
      %v2061 = vrot.slane %v2051, %v2060
      %v2062 = vmul.f32 %v1209, %v2057
      %v2063 = vmul.f32 %v1209, %v2061
      %v2064 = vmul.f32 %v1213, %v2057
      %v2065 = vmul.f32 %v1213, %v2061
      %v2066 = vmul.f32 %v1217, %v2057
      %v2067 = vmul.f32 %v1217, %v2061
      %v2068 = vmul.f32 %v1221, %v2057
      %v2069 = vmul.f32 %v1221, %v2061
      %v2070 = vmul.f32 %v1225, %v2057
      %v2071 = vmul.f32 %v1225, %v2061
      %v2072 = vmul.f32 %v1229, %v2057
      %v2073 = vmul.f32 %v1229, %v2061
      %v2074 = vmul.f32 %v1233, %v2057
      %v2075 = vmul.f32 %v1233, %v2061
      %v2076 = vmul.f32 %v1237, %v2057
      %v2077 = vmul.f32 %v1237, %v2061
      %v2078 = vmul.f32 %v1241, %v2057
      %v2079 = vmul.f32 %v1241, %v2061
      %v2080 = vmul.f32 %v1245, %v2057
      %v2081 = vmul.f32 %v1245, %v2061
      %v2082 = vmul.f32 %v1249, %v2057
      %v2083 = vmul.f32 %v1249, %v2061
      %v2084 = vmul.f32 %v1253, %v2057
      %v2085 = vmul.f32 %v1253, %v2061
      %v2086 = vmul.f32 %v1257, %v2057
      %v2087 = vmul.f32 %v1257, %v2061
      %v2088 = vmul.f32 %v1261, %v2057
      %v2089 = vmul.f32 %v1261, %v2061
      %v2090 = vmul.f32 %v1265, %v2057
      %v2091 = vmul.f32 %v1265, %v2061
      %v2092 = vmul.f32 %v1269, %v2057
      %v2093 = vmul.f32 %v1269, %v2061
      %v2094 = vadd.f32 %v2012, %v2062
      %v2095 = vadd.f32 %v2013, %v2063
      %v2096 = vadd.f32 %v2014, %v2064
      %v2097 = vadd.f32 %v2015, %v2065
      %v2098 = vadd.f32 %v2016, %v2066
      %v2099 = vadd.f32 %v2017, %v2067
      %v2100 = vadd.f32 %v2018, %v2068
      %v2101 = vadd.f32 %v2019, %v2069
      %v2102 = vadd.f32 %v2020, %v2070
      %v2103 = vadd.f32 %v2021, %v2071
      %v2104 = vadd.f32 %v2022, %v2072
      %v2105 = vadd.f32 %v2023, %v2073
      %v2106 = vadd.f32 %v2024, %v2074
      %v2107 = vadd.f32 %v2025, %v2075
      %v2108 = vadd.f32 %v2026, %v2076
      %v2109 = vadd.f32 %v2027, %v2077
      %v2110 = vadd.f32 %v2028, %v2078
      %v2111 = vadd.f32 %v2029, %v2079
      %v2112 = vadd.f32 %v2030, %v2080
      %v2113 = vadd.f32 %v2031, %v2081
      %v2114 = vadd.f32 %v2032, %v2082
      %v2115 = vadd.f32 %v2033, %v2083
      %v2116 = vadd.f32 %v2034, %v2084
      %v2117 = vadd.f32 %v2035, %v2085
      %v2118 = vadd.f32 %v2036, %v2086
      %v2119 = vadd.f32 %v2037, %v2087
      %v2120 = vadd.f32 %v2038, %v2088
      %v2121 = vadd.f32 %v2039, %v2089
      %v2122 = vadd.f32 %v2040, %v2090
      %v2123 = vadd.f32 %v2041, %v2091
      %v2124 = vadd.f32 %v2042, %v2092
      %v2125 = vadd.f32 %v2043, %v2093
      %v2126 = vmax.f32 %v2094, 0.0
      %v2127 = vmax.f32 %v2095, 0.0
      %v2128 = vmax.f32 %v2096, 0.0
      %v2129 = vmax.f32 %v2097, 0.0
      %v2130 = vmax.f32 %v2098, 0.0
      %v2131 = vmax.f32 %v2099, 0.0
      %v2132 = vmax.f32 %v2100, 0.0
      %v2133 = vmax.f32 %v2101, 0.0
      %v2134 = vmax.f32 %v2102, 0.0
      %v2135 = vmax.f32 %v2103, 0.0
      %v2136 = vmax.f32 %v2104, 0.0
      %v2137 = vmax.f32 %v2105, 0.0
      %v2138 = vmax.f32 %v2106, 0.0
      %v2139 = vmax.f32 %v2107, 0.0
      %v2140 = vmax.f32 %v2108, 0.0
      %v2141 = vmax.f32 %v2109, 0.0
      %v2142 = vmax.f32 %v2110, 0.0
      %v2143 = vmax.f32 %v2111, 0.0
      %v2144 = vmax.f32 %v2112, 0.0
      %v2145 = vmax.f32 %v2113, 0.0
      %v2146 = vmax.f32 %v2114, 0.0
      %v2147 = vmax.f32 %v2115, 0.0
      %v2148 = vmax.f32 %v2116, 0.0
      %v2149 = vmax.f32 %v2117, 0.0
      %v2150 = vmax.f32 %v2118, 0.0
      %v2151 = vmax.f32 %v2119, 0.0
      %v2152 = vmax.f32 %v2120, 0.0
      %v2153 = vmax.f32 %v2121, 0.0
      %v2154 = vmax.f32 %v2122, 0.0
      %v2155 = vmax.f32 %v2123, 0.0
      %v2156 = vmax.f32 %v2124, 0.0
      %v2157 = vmax.f32 %v2125, 0.0
      %v2158 = vadd.f32 %v2126, %v2127
      %2159 = vadd.xlane.f32.xlu0 %v2158
      %v2160 = vpop.xlane.xlu0 %2159
      %v2161 = vadd.f32 %v2128, %v2129
      %2162 = vadd.xlane.f32.xlu0 %v2161
      %v2163 = vpop.xlane.xlu0 %2162
      %v2164 = vadd.f32 %v2130, %v2131
      %2165 = vadd.xlane.f32.xlu0 %v2164
      %v2166 = vpop.xlane.xlu0 %2165
      %v2167 = vadd.f32 %v2132, %v2133
      %2168 = vadd.xlane.f32.xlu0 %v2167
      %v2169 = vpop.xlane.xlu0 %2168
      %v2170 = vadd.f32 %v2134, %v2135
      %2171 = vadd.xlane.f32.xlu0 %v2170
      %v2172 = vpop.xlane.xlu0 %2171
      %v2173 = vadd.f32 %v2136, %v2137
      %2174 = vadd.xlane.f32.xlu0 %v2173
      %v2175 = vpop.xlane.xlu0 %2174
      %v2176 = vadd.f32 %v2138, %v2139
      %2177 = vadd.xlane.f32.xlu0 %v2176
      %v2178 = vpop.xlane.xlu0 %2177
      %v2179 = vadd.f32 %v2140, %v2141
      %2180 = vadd.xlane.f32.xlu0 %v2179
      %v2181 = vpop.xlane.xlu0 %2180
      %v2182 = vadd.f32 %v2142, %v2143
      %2183 = vadd.xlane.f32.xlu0 %v2182
      %v2184 = vpop.xlane.xlu0 %2183
      %v2185 = vadd.f32 %v2144, %v2145
      %2186 = vadd.xlane.f32.xlu0 %v2185
      %v2187 = vpop.xlane.xlu0 %2186
      %v2188 = vadd.f32 %v2146, %v2147
      %2189 = vadd.xlane.f32.xlu0 %v2188
      %v2190 = vpop.xlane.xlu0 %2189
      %v2191 = vadd.f32 %v2148, %v2149
      %2192 = vadd.xlane.f32.xlu0 %v2191
      %v2193 = vpop.xlane.xlu0 %2192
      %v2194 = vadd.f32 %v2150, %v2151
      %2195 = vadd.xlane.f32.xlu0 %v2194
      %v2196 = vpop.xlane.xlu0 %2195
      %v2197 = vadd.f32 %v2152, %v2153
      %2198 = vadd.xlane.f32.xlu0 %v2197
      %v2199 = vpop.xlane.xlu0 %2198
      %v2200 = vadd.f32 %v2154, %v2155
      %2201 = vadd.xlane.f32.xlu0 %v2200
      %v2202 = vpop.xlane.xlu0 %2201
      %v2203 = vadd.f32 %v2156, %v2157
      %2204 = vadd.xlane.f32.xlu0 %v2203
      %v2205 = vpop.xlane.xlu0 %2204
      %v2206 = vmul.f32 %v2160, %v131
      %v2207 = vmul.f32 %v2163, %v132
      %v2208 = vmul.f32 %v2166, %v133
      %v2209 = vmul.f32 %v2169, %v134
      %v2210 = vmul.f32 %v2172, %v135
      %v2211 = vmul.f32 %v2175, %v136
      %v2212 = vmul.f32 %v2178, %v137
      %v2213 = vmul.f32 %v2181, %v138
      %v2214 = vmul.f32 %v2184, %v139
      %v2215 = vmul.f32 %v2187, %v140
      %v2216 = vmul.f32 %v2190, %v141
      %v2217 = vmul.f32 %v2193, %v142
      %v2218 = vmul.f32 %v2196, %v143
      %v2219 = vmul.f32 %v2199, %v144
      %v2220 = vmul.f32 %v2202, %v145
      %v2221 = vmul.f32 %v2205, %v146
      %v2222 = vsel %vm780, %v2206, 0.0
      %v2223 = vsel %vm780, %v2207, 0.0
      %v2224 = vadd.f32 %v2222, %v2223
      %v2225 = vsel %vm780, %v2208, 0.0
      %v2226 = vadd.f32 %v2224, %v2225
      %v2227 = vsel %vm780, %v2209, 0.0
      %v2228 = vadd.f32 %v2226, %v2227
      %v2229 = vsel %vm780, %v2210, 0.0
      %v2230 = vadd.f32 %v2228, %v2229
      %v2231 = vsel %vm780, %v2211, 0.0
      %v2232 = vadd.f32 %v2230, %v2231
      %v2233 = vsel %vm780, %v2212, 0.0
      %v2234 = vadd.f32 %v2232, %v2233
      %v2235 = vsel %vm780, %v2213, 0.0
      %v2236 = vadd.f32 %v2234, %v2235
      %v2237 = vsel %vm780, %v2214, 0.0
      %v2238 = vadd.f32 %v2236, %v2237
      %v2239 = vsel %vm780, %v2215, 0.0
      %v2240 = vadd.f32 %v2238, %v2239
      %v2241 = vsel %vm780, %v2216, 0.0
      %v2242 = vadd.f32 %v2240, %v2241
      %v2243 = vsel %vm780, %v2217, 0.0
      %v2244 = vadd.f32 %v2242, %v2243
      %v2245 = vsel %vm780, %v2218, 0.0
      %v2246 = vadd.f32 %v2244, %v2245
      %v2247 = vsel %vm780, %v2219, 0.0
      %v2248 = vadd.f32 %v2246, %v2247
      %v2249 = vsel %vm780, %v2220, 0.0
      %v2250 = vadd.f32 %v2248, %v2249
      %v2251 = vsel %vm780, %v2221, 0.0
      %v2252 = vadd.f32 %v2250, %v2251
      %v2253 = vrot.slane %v2252, 4
      %v2254 = vadd.f32 %v2252, %v2253
      %v2255 = vrot.slane %v2254, 2
      %v2256 = vadd.f32 %v2254, %v2255
      %v2257 = vrot.slane %v2256, 1
      %v2258 = vadd.f32 %v2256, %v2257
      %v2259 = vadd.f32 %v1878, %v2258
      %vm2260 = vcmp.eq.s32.totalorder %v36, 1
      %2262 = vset.pattern.permute.xlu0 0
      %2263 = vperm.xlu0 %2262, %v2259
      %v2264 = vpop.permute.xlu0 %2263
      %v2266 = vsel %vm2260, %v2264, 0.0
      %v2267 = vadd.f32 %v1494, %v2266
    $region42: #{tpu_custom_call.1} parent=1 // loop_footer
      %s42 = sadd.s32 1, %s38
    $region43: #{tpu_custom_call.1} parent=1 // loop_footer_branch
      %37 = sbr.rel target = $region39
    $region44: #{tpu_custom_call.1} parent=1 // loop_exit
      _
    %v2268 = vmul.f32 %v43, 0.00390625
    %v2269 = vld [vmem:[#allocation2] sm:$0x1]
    %2271 = vset.pattern.permute.xlu0 0
    %2272 = vperm.xlu0 %2271, %v2269
    %v2273 = vpop.permute.xlu0 %2272
    %v2275 = vlaneseq
    %v2276 = vshrl.u32 %v2275, 7
    %v2277 = vsub.s32 0, %v2276
    %v2278 = vrot.slane %v2273, %v2277
    %v2279 = vadd.f32 %v2268, %v2278
    %v2280 = vand.u32 2147483647, %v2279
    %v2281 = vsub.f32 0.0, %v2280
    %v2282 = vmul.f32 %v2281, 1.442695
    %v2283 = vpow.pop %v2282
    %vm2284 = vcmp.ge.f32.partialorder %v2279, 0.0
    %v2285 = vadd.f32 %v2283, 1.0
    %v2286 = vrcp.pop %v2285
    %v2287 = vmul.f32 1.0, %v2286
    %v2288 = vmul.f32 %v2283, %v2286
    %v2289 = vsel %vm2284, %v2287, %v2288
    %vm2290 = vcmask 8192
    %2291 = vst.msk [vmem:[#allocation3] sm:$0x1] %vm2290, %v2289
    // Predicated region
    $region45: #{tpu_custom_call.1} parent=1 // pred_check
      _
    $region46: #{tpu_custom_call.1} parent=1 // pred_check_branch
      %2293 = sbr.rel (0) target = $region48
    $region47: #{tpu_custom_call.1} parent=1 // pred_region
      %s2295 = ssub.s32 16, 16
      %2296 = vsyncadd [#allocation4], %s2295
      %s2298 = sshll.u32 [#allocation3], 4
      %s2299 = int_to_ptr.vmem [resolvable:$true] %s2298
      %2301 = dma.vmem_to_hbm [thread:$0]  %s2299, 16, %s9, [#allocation4]
    $region48: #{tpu_custom_call.1} parent=1 // pred_fallthru
      _
    // Predicated region
    $region49: #{tpu_custom_call.1} parent=1 // pred_check
      _
    $region50: #{tpu_custom_call.1} parent=1 // pred_check_branch
      %2303 = sbr.rel (0) target = $region52
    $region51: #{tpu_custom_call.1} parent=1 // pred_region
      %2304 = dma.done [#allocation4], 16
    $region52: #{tpu_custom_call.1} parent=1 // pred_fallthru
      _
    %2305 = vsyncpa [#allocation4], 1

</llo_original>
